<compile_context>
chip_gen: v7x
topology: tpu7x:2x2x1
jax: 0.10.0
libtpu: 0.0.40
codegen_flags: <defaults>
</compile_context>

<pallas_src>
import math

import jax
import jax.numpy as jnp
from jax.experimental import pallas as pl
from jax.experimental.pallas import tpu as pltpu

D_MODEL = 224
D_FF = D_MODEL * 4          # 896, already a multiple of 128
D_PAD = 256                 # d_model padded up to the next multiple of 128

_INV_SQRT2 = 1.0 / math.sqrt(2.0)


def _round_up(x, m):
    return ((x + m - 1) // m) * m


def ffn_kernel(x_ref, w1_ref, b1_ref, w2_ref, b2_ref, o_ref):
    # x_ref:  (TM, D_PAD)   bf16   (streamed row tile)
    # w1_ref: (D_PAD, D_FF) bf16   b1_ref: (1, D_FF)  f32   (VMEM-resident)
    # w2_ref: (D_FF, D_PAD) bf16   b2_ref: (1, D_PAD) f32   (VMEM-resident)
    # o_ref:  (TM, D_PAD)   f32

    # fc1 on the MXU (bf16 inputs, f32 accumulate)
    h = jnp.dot(x_ref[...], w1_ref[...], preferred_element_type=jnp.float32)
    h = h + b1_ref[...]

    # dropout (eval mode) == identity

    # exact (erf-based) GELU, kept in f32; erf uses the EUP slot.
    h = 0.5 * h * (1.0 + jax.lax.erf(h * _INV_SQRT2))

    # fc2 on the MXU
    o = jnp.dot(h.astype(jnp.bfloat16), w2_ref[...],
                preferred_element_type=jnp.float32)
    o_ref[...] = (o + b2_ref[...]).astype(o_ref.dtype)


def feed_forward_network(x, w1, b1, w2, b2, *, tm=512):
    """x: (batch, seq, d_model) f32 -> (batch, seq, d_model) f32.

    Weights are stored as (in_features, out_features) so the kernel computes
    x @ W + b (equivalent to PyTorch's x @ W.T with W of shape (out, in)).
    """
    B, S, D = x.shape
    assert D == D_MODEL
    M = B * S

    # Row-tile size: multiple of 16 (bf16 sublane packing), capped at `tm`
    # (128-aligned for large M, friendly to v5e's 128x128 MXU tiles).
    TM = min(tm, _round_up(M, 16))
    M_pad = _round_up(M, TM)

    # Pad rows up to a multiple of TM and lanes 224 -> 256; cast to bf16.
    x2d = x.reshape(M, D)
    x_p = jnp.pad(x2d, ((0, M_pad - M), (0, D_PAD - D))).astype(jnp.bfloat16)
    w1_p = jnp.pad(w1, ((0, D_PAD - D), (0, 0))).astype(jnp.bfloat16)   # (256, 896)
    w2_p = jnp.pad(w2, ((0, 0), (0, D_PAD - D))).astype(jnp.bfloat16)   # (896, 256)
    b1_2d = b1.reshape(1, D_FF).astype(jnp.float32)
    b2_2d = jnp.pad(b2, (0, D_PAD - D)).reshape(1, D_PAD).astype(jnp.float32)

    grid = (M_pad // TM,)

    cost = pl.CostEstimate(
        flops=2 * M_pad * (D_PAD * D_FF + D_FF * D_PAD),
        transcendentals=M_pad * D_FF,
        bytes_accessed=(x_p.size * 2 + w1_p.size * 2 + w2_p.size * 2
                        + b1_2d.size * 4 + b2_2d.size * 4
                        + M_pad * D_PAD * 4),
    )

    out_p = pl.pallas_call(
        ffn_kernel,
        out_shape=jax.ShapeDtypeStruct((M_pad, D_PAD), jnp.float32),
        grid=grid,
        in_specs=[
            pl.BlockSpec((TM, D_PAD), lambda i: (i, 0)),      # streamed x rows
            pl.BlockSpec((D_PAD, D_FF), lambda i: (0, 0)),    # resident w1
            pl.BlockSpec((1, D_FF), lambda i: (0, 0)),        # resident b1
            pl.BlockSpec((D_FF, D_PAD), lambda i: (0, 0)),    # resident w2
            pl.BlockSpec((1, D_PAD), lambda i: (0, 0)),       # resident b2
        ],
        out_specs=pl.BlockSpec((TM, D_PAD), lambda i: (i, 0)),
        compiler_params=pltpu.CompilerParams(
            dimension_semantics=("parallel",),   # shard row tiles across TCs (v7x)
            vmem_limit_bytes=32 << 20,           # tiled working set + headroom
        ),
        cost_estimate=cost,
    )(x_p, w1_p, b1_2d, w2_p, b2_2d)

    # Strip the row/lane padding.
    return out_p[:M, :D].reshape(B, S, D)


def _reference(x, w1, b1, w2, b2):
    h = x @ w1 + b1
    h = 0.5 * h * (1.0 + jax.lax.erf(h / jnp.sqrt(2.0)))
    return h @ w2 + b2


if __name__ == "__main__":
    key = jax.random.PRNGKey(0)
    k_x, k_w1, k_b1, k_w2, k_b2 = jax.random.split(key, 5)

    batch, seq = 2, 8
    x = jax.random.normal(k_x, (batch, seq, D_MODEL), dtype=jnp.float32)

    # deterministic "kaiming-uniform-like" init (nn.Linear bound 1/sqrt(fan_in))
    bound1 = 1.0 / math.sqrt(D_MODEL)
    w1 = jax.random.uniform(k_w1, (D_MODEL, D_FF), jnp.float32, -bound1, bound1)
    b1 = jax.random.uniform(k_b1, (D_FF,), jnp.float32, -bound1, bound1)
    bound2 = 1.0 / math.sqrt(D_FF)
    w2 = jax.random.uniform(k_w2, (D_FF, D_MODEL), jnp.float32, -bound2, bound2)
    b2 = jax.random.uniform(k_b2, (D_MODEL,), jnp.float32, -bound2, bound2)

    out = feed_forward_network(x, w1, b1, w2, b2)
    out = jax.block_until_ready(out)

    ref = _reference(x.reshape(-1, D_MODEL), w1, b1, w2, b2).reshape(x.shape)
    assert out.shape == (batch, seq, D_MODEL)
    # bf16 MXU path: tolerance relaxed vs. the pure-f32 reference.
    max_err = float(jnp.max(jnp.abs(out - ref)))
    assert jnp.allclose(out, ref, atol=2e-2, rtol=2e-2), max_err

    print("KERNEL_OK")
</pallas_src>

<mosaic_0001>
module attributes {stable_mosaic.version = 11 : i64} {
  func.func @ffn_kernel(%arg0: i32, %arg1: memref<16x256xbf16, #tpu.memory_space<vmem>>, %arg2: memref<256x896xbf16, #tpu.memory_space<vmem>>, %arg3: memref<1x896xf32, #tpu.memory_space<vmem>>, %arg4: memref<896x256xbf16, #tpu.memory_space<vmem>>, %arg5: memref<1x256xf32, #tpu.memory_space<vmem>>, %arg6: memref<16x256xf32, #tpu.memory_space<vmem>>) attributes {dimension_semantics = [#tpu.dimension_semantics<parallel>], iteration_bounds = array<i64: 1>, scalar_prefetch = 0 : i64, scratch_operands = 0 : i64, tpu.core_type = #tpu.core_type<tc>, window_params = [{transform_indices = @transform_0, window_bounds = array<i64: 16, 256>}, {pipeline_mode = #tpu.pipeline_mode<synchronous>, transform_indices = @transform_1, window_bounds = array<i64: 256, 896>}, {pipeline_mode = #tpu.pipeline_mode<synchronous>, transform_indices = @transform_2, window_bounds = array<i64: 1, 896>}, {pipeline_mode = #tpu.pipeline_mode<synchronous>, transform_indices = @transform_3, window_bounds = array<i64: 896, 256>}, {pipeline_mode = #tpu.pipeline_mode<synchronous>, transform_indices = @transform_4, window_bounds = array<i64: 1, 256>}, {transform_indices = @transform_5, window_bounds = array<i64: 16, 256>}]} {
    %c0 = arith.constant 0 : index
    %c0_0 = arith.constant 0 : index
    %0 = vector.load %arg1[%c0, %c0_0] : memref<16x256xbf16, #tpu.memory_space<vmem>>, vector<16x256xbf16>
    %c0_1 = arith.constant 0 : index
    %c0_2 = arith.constant 0 : index
    %1 = vector.load %arg2[%c0_1, %c0_2] : memref<256x896xbf16, #tpu.memory_space<vmem>>, vector<256x896xbf16>
    %cst = arith.constant dense<0.000000e+00> : vector<16x896xf32>
    %2 = tpu.matmul %0, %1, %cst {dimension_numbers = #tpu.dot_dimension_numbers<[1], [0], [0], [1], [0, 0, 1, 1], [], []>} : vector<16x256xbf16>, vector<256x896xbf16>, vector<16x896xf32> -> vector<16x896xf32>
    %c0_3 = arith.constant 0 : index
    %c0_4 = arith.constant 0 : index
    %3 = vector.load %arg3[%c0_3, %c0_4] : memref<1x896xf32, #tpu.memory_space<vmem>>, vector<1x896xf32>
    %4 = vector.broadcast %3 : vector<1x896xf32> to vector<16x896xf32>
    %5 = arith.addf %2, %4 : vector<16x896xf32>
    %cst_5 = arith.constant 5.000000e-01 : f32
    %6 = vector.broadcast %cst_5 : f32 to vector<16x896xf32>
    %7 = arith.mulf %6, %5 : vector<16x896xf32>
    %cst_6 = arith.constant 0.707106769 : f32
    %8 = vector.broadcast %cst_6 : f32 to vector<16x896xf32>
    %9 = arith.mulf %5, %8 : vector<16x896xf32>
    %10 = math.erf %9 : vector<16x896xf32>
    %cst_7 = arith.constant 1.000000e+00 : f32
    %11 = vector.broadcast %cst_7 : f32 to vector<16x896xf32>
    %12 = arith.addf %11, %10 : vector<16x896xf32>
    %13 = arith.mulf %7, %12 : vector<16x896xf32>
    %14 = arith.truncf %13 : vector<16x896xf32> to vector<16x896xbf16>
    %c0_8 = arith.constant 0 : index
    %c0_9 = arith.constant 0 : index
    %15 = vector.load %arg4[%c0_8, %c0_9] : memref<896x256xbf16, #tpu.memory_space<vmem>>, vector<896x256xbf16>
    %cst_10 = arith.constant dense<0.000000e+00> : vector<16x256xf32>
    %16 = tpu.matmul %14, %15, %cst_10 {dimension_numbers = #tpu.dot_dimension_numbers<[1], [0], [0], [1], [0, 0, 1, 1], [], []>} : vector<16x896xbf16>, vector<896x256xbf16>, vector<16x256xf32> -> vector<16x256xf32>
    %c0_11 = arith.constant 0 : index
    %c0_12 = arith.constant 0 : index
    %17 = vector.load %arg5[%c0_11, %c0_12] : memref<1x256xf32, #tpu.memory_space<vmem>>, vector<1x256xf32>
    %18 = vector.broadcast %17 : vector<1x256xf32> to vector<16x256xf32>
    %19 = arith.addf %16, %18 : vector<16x256xf32>
    %c0_13 = arith.constant 0 : index
    %c0_14 = arith.constant 0 : index
    %20 = vector.load %arg6[%c0_13, %c0_14] : memref<16x256xf32, #tpu.memory_space<vmem>>, vector<16x256xf32>
    tpu.vector_store %arg6[%c0_13, %c0_14], %19 {strides = array<i32>} : memref<16x256xf32, #tpu.memory_space<vmem>>, vector<16x256xf32>,
    return
  }
  func.func @transform_0(%arg0: i32) -> (i32, i32) {
    %c0_i32 = arith.constant 0 : i32
    %c0_i32_0 = arith.constant 0 : i32
    return %arg0, %c0_i32 : i32, i32
  }
  func.func @transform_1(%arg0: i32) -> (i32, i32) {
    %c0_i32 = arith.constant 0 : i32
    %c0_i32_0 = arith.constant 0 : i32
    %c0_i32_1 = arith.constant 0 : i32
    return %c0_i32, %c0_i32_0 : i32, i32
  }
  func.func @transform_2(%arg0: i32) -> (i32, i32) {
    %c0_i32 = arith.constant 0 : i32
    %c0_i32_0 = arith.constant 0 : i32
    %c0_i32_1 = arith.constant 0 : i32
    return %c0_i32, %c0_i32_0 : i32, i32
  }
  func.func @transform_3(%arg0: i32) -> (i32, i32) {
    %c0_i32 = arith.constant 0 : i32
    %c0_i32_0 = arith.constant 0 : i32
    %c0_i32_1 = arith.constant 0 : i32
    return %c0_i32, %c0_i32_0 : i32, i32
  }
  func.func @transform_4(%arg0: i32) -> (i32, i32) {
    %c0_i32 = arith.constant 0 : i32
    %c0_i32_0 = arith.constant 0 : i32
    %c0_i32_1 = arith.constant 0 : i32
    return %c0_i32, %c0_i32_0 : i32, i32
  }
  func.func @transform_5(%arg0: i32) -> (i32, i32) {
    %c0_i32 = arith.constant 0 : i32
    %c0_i32_0 = arith.constant 0 : i32
    return %arg0, %c0_i32 : i32, i32
  }
}

</mosaic_0001>

<llo_original>
// kernel: tpu_custom_call.1
$region0: #{tpu_custom_call.1}
  #allocation0 [shape = 'u32[]', space=smem, size = 0x4, offset = 0x4, fixed_abs, tag = 'smem constant byte address 0x4 - core index']
  #allocation1 [shape = 'u32[144,128]{1,0:T(1,128)}', space=vmem, size = 0x12000, scoped, tag = 'internal scratch']
  %s0 = inlined_call_operand.hbm [shape: bf16[16,256], index: 0, kind: input, shape index: {}]
  %s1 = inlined_call_operand.hbm [shape: bf16[256,896], index: 1, kind: input, shape index: {}]
  %s2 = inlined_call_operand.vmem [shape: f32[1,896], index: 2, kind: input, shape index: {}]
  %s3 = inlined_call_operand.hbm [shape: bf16[896,256], index: 3, kind: input, shape index: {}]
  %s4 = inlined_call_operand.vmem [shape: f32[1,256], index: 4, kind: input, shape index: {}]
  %s5 = inlined_call_operand.hbm [shape: f32[16,256], index: 5, kind: output, shape index: {}]
  %s6 = sld [smem:[#allocation0]]
  $region42: #{tpu_custom_call.1} parent=0
    _
  %s8 = ssub.s32 1, %s6
  %s9 = scalar_select 0, %s8, %s6
  $region1: #{tpu_custom_call.1} parent=0
    #allocation2 [shape = 'u8[8192]{0}', space=vmem, size = 0x2000, scoped, tag = 'input window, operand 0, single buffered']
    #allocation3 [shape = 's32[1]{0}', space=sflag, size = 0x4, scoped, tag = 'scoped memory for tpu_custom_call.1']
    #allocation4 [shape = 's32[1]{0}', space=sflag, size = 0x4, scoped, tag = 'scoped memory for tpu_custom_call.1']
    #allocation5 [shape = 'u8[458752]{0}', space=vmem, size = 0x70000, scoped, tag = 'input window, operand 1, single buffered']
    #allocation6 [shape = 's32[1]{0}', space=sflag, size = 0x4, scoped, tag = 'scoped memory for tpu_custom_call.1']
    #allocation7 [shape = 'u8[458752]{0}', space=vmem, size = 0x70000, scoped, tag = 'input window, operand 3, single buffered']
    #allocation8 [shape = 'u8[16384]{0}', space=vmem, size = 0x4000, scoped, tag = 'output window, operand 0, single buffered']
    %10 = vsyncpa [#allocation3], 0
    %11 = vsyncpa [#allocation6], 0
    %12 = vsyncpa [#allocation4], 0
    // Predicated region
    $region2: #{tpu_custom_call.1} parent=1 // pred_check
      _
    $region3: #{tpu_custom_call.1} parent=1 // pred_check_branch
      %14 = sbr.rel (0) target = $region5
    $region4: #{tpu_custom_call.1} parent=1 // pred_region
      %s16 = ssub.s32 256, 256
      %17 = vsyncadd [#allocation3], %s16
      %s18 = sshll.u32 [#allocation2], 4
      %s19 = int_to_ptr.vmem [resolvable:$true] %s18
      %24 = dma.hbm_to_vmem [thread:$0]  %s0, 256, %s19, [#allocation3], 128, 128, 8
    $region5: #{tpu_custom_call.1} parent=1 // pred_fallthru
      _
    // Predicated region
    $region6: #{tpu_custom_call.1} parent=1 // pred_check
      _
    $region7: #{tpu_custom_call.1} parent=1 // pred_check_branch
      %26 = sbr.rel (0) target = $region9
    $region8: #{tpu_custom_call.1} parent=1 // pred_region
      %s28 = ssub.s32 14336, 14336
      %29 = vsyncadd [#allocation6], %s28
      %s30 = sshll.u32 [#allocation5], 4
      %s31 = int_to_ptr.vmem [resolvable:$true] %s30
      %36 = dma.hbm_to_vmem [thread:$0]  %s1, 14336, %s31, [#allocation6], 448, 448, 28
    $region9: #{tpu_custom_call.1} parent=1 // pred_fallthru
      _
    // Predicated region
    $region10: #{tpu_custom_call.1} parent=1 // pred_check
      _
    $region11: #{tpu_custom_call.1} parent=1 // pred_check_branch
      %38 = sbr.rel (0) target = $region13
    $region12: #{tpu_custom_call.1} parent=1 // pred_region
      _
    $region13: #{tpu_custom_call.1} parent=1 // pred_fallthru
      _
    // Predicated region
    $region14: #{tpu_custom_call.1} parent=1 // pred_check
      _
    $region15: #{tpu_custom_call.1} parent=1 // pred_check_branch
      %40 = sbr.rel (0) target = $region17
    $region16: #{tpu_custom_call.1} parent=1 // pred_region
      %s42 = ssub.s32 14336, 14336
      %43 = vsyncadd [#allocation6], %s42
      %s44 = sshll.u32 [#allocation7], 4
      %s45 = int_to_ptr.vmem [resolvable:$true] %s44
      %50 = dma.hbm_to_vmem [thread:$0]  %s3, 14336, %s45, [#allocation6], 128, 128, 8
    $region17: #{tpu_custom_call.1} parent=1 // pred_fallthru
      _
    // Predicated region
    $region18: #{tpu_custom_call.1} parent=1 // pred_check
      _
    $region19: #{tpu_custom_call.1} parent=1 // pred_check_branch
      %52 = sbr.rel (0) target = $region21
    $region20: #{tpu_custom_call.1} parent=1 // pred_region
      _
    $region21: #{tpu_custom_call.1} parent=1 // pred_fallthru
      _
    // Predicated region
    $region22: #{tpu_custom_call.1} parent=1 // pred_check
      _
    $region23: #{tpu_custom_call.1} parent=1 // pred_check_branch
      %54 = sbr.rel (0) target = $region25
    $region24: #{tpu_custom_call.1} parent=1 // pred_region
      %55 = dma.done [#allocation3], 256
    $region25: #{tpu_custom_call.1} parent=1 // pred_fallthru
      _
    // Predicated region
    $region26: #{tpu_custom_call.1} parent=1 // pred_check
      _
    $region27: #{tpu_custom_call.1} parent=1 // pred_check_branch
      %57 = sbr.rel (0) target = $region29
    $region28: #{tpu_custom_call.1} parent=1 // pred_region
      %58 = dma.done [#allocation6], 14336
    $region29: #{tpu_custom_call.1} parent=1 // pred_fallthru
      _
    // Predicated region
    $region30: #{tpu_custom_call.1} parent=1 // pred_check
      _
    $region31: #{tpu_custom_call.1} parent=1 // pred_check_branch
      %60 = sbr.rel (0) target = $region33
    $region32: #{tpu_custom_call.1} parent=1 // pred_region
      %61 = dma.done [#allocation6], 14336
    $region33: #{tpu_custom_call.1} parent=1 // pred_fallthru
      _
    %v63 = vld [vmem:[#allocation2] sm:$0xff]
    %v64 = vld [vmem:[#allocation2 + $0x8] sm:$0xff]
    %v65 = vld [vmem:[#allocation5] sm:$0xff]
    %v66 = vld [vmem:[#allocation5 + $0x8] sm:$0xff]
    %v67 = vld [vmem:[#allocation5 + $0x10] sm:$0xff]
    %v68 = vld [vmem:[#allocation5 + $0x18] sm:$0xf]
    %v69 = vld [vmem:[#allocation5 + $0x1c] sm:$0xff]
    %v70 = vld [vmem:[#allocation5 + $0x24] sm:$0xff]
    %v71 = vld [vmem:[#allocation5 + $0x2c] sm:$0xff]
    %v72 = vld [vmem:[#allocation5 + $0x34] sm:$0xf]
    %v73 = vld [vmem:[#allocation5 + $0x38] sm:$0xff]
    %v74 = vld [vmem:[#allocation5 + $0x40] sm:$0xff]
    %v75 = vld [vmem:[#allocation5 + $0x48] sm:$0xff]
    %v76 = vld [vmem:[#allocation5 + $0x50] sm:$0xf]
    %v77 = vld [vmem:[#allocation5 + $0x54] sm:$0xff]
    %v78 = vld [vmem:[#allocation5 + $0x5c] sm:$0xff]
    %v79 = vld [vmem:[#allocation5 + $0x64] sm:$0xff]
    %v80 = vld [vmem:[#allocation5 + $0x6c] sm:$0xf]
    %v81 = vld [vmem:[#allocation5 + $0x70] sm:$0xff]
    %v82 = vld [vmem:[#allocation5 + $0x78] sm:$0xff]
    %v83 = vld [vmem:[#allocation5 + $0x80] sm:$0xff]
    %v84 = vld [vmem:[#allocation5 + $0x88] sm:$0xf]
    %v85 = vld [vmem:[#allocation5 + $0x8c] sm:$0xff]
    %v86 = vld [vmem:[#allocation5 + $0x94] sm:$0xff]
    %v87 = vld [vmem:[#allocation5 + $0x9c] sm:$0xff]
    %v88 = vld [vmem:[#allocation5 + $0xa4] sm:$0xf]
    %v89 = vld [vmem:[#allocation5 + $0xa8] sm:$0xff]
    %v90 = vld [vmem:[#allocation5 + $0xb0] sm:$0xff]
    %v91 = vld [vmem:[#allocation5 + $0xb8] sm:$0xff]
    %v92 = vld [vmem:[#allocation5 + $0xc0] sm:$0xf]
    %v93 = vld [vmem:[#allocation5 + $0xc4] sm:$0xff]
    %v94 = vld [vmem:[#allocation5 + $0xcc] sm:$0xff]
    %v95 = vld [vmem:[#allocation5 + $0xd4] sm:$0xff]
    %v96 = vld [vmem:[#allocation5 + $0xdc] sm:$0xf]
    %v97 = vld [vmem:[#allocation5 + $0xe0] sm:$0xff]
    %v98 = vld [vmem:[#allocation5 + $0xe8] sm:$0xff]
    %v99 = vld [vmem:[#allocation5 + $0xf0] sm:$0xff]
    %v100 = vld [vmem:[#allocation5 + $0xf8] sm:$0xf]
    %v101 = vld [vmem:[#allocation5 + $0xfc] sm:$0xff]
    %v102 = vld [vmem:[#allocation5 + $0x104] sm:$0xff]
    %v103 = vld [vmem:[#allocation5 + $0x10c] sm:$0xff]
    %v104 = vld [vmem:[#allocation5 + $0x114] sm:$0xf]
    %v105 = vld [vmem:[#allocation5 + $0x118] sm:$0xff]
    %v106 = vld [vmem:[#allocation5 + $0x120] sm:$0xff]
    %v107 = vld [vmem:[#allocation5 + $0x128] sm:$0xff]
    %v108 = vld [vmem:[#allocation5 + $0x130] sm:$0xf]
    %v109 = vld [vmem:[#allocation5 + $0x134] sm:$0xff]
    %v110 = vld [vmem:[#allocation5 + $0x13c] sm:$0xff]
    %v111 = vld [vmem:[#allocation5 + $0x144] sm:$0xff]
    %v112 = vld [vmem:[#allocation5 + $0x14c] sm:$0xf]
    %v113 = vld [vmem:[#allocation5 + $0x150] sm:$0xff]
    %v114 = vld [vmem:[#allocation5 + $0x158] sm:$0xff]
    %v115 = vld [vmem:[#allocation5 + $0x160] sm:$0xff]
    %v116 = vld [vmem:[#allocation5 + $0x168] sm:$0xf]
    %v117 = vld [vmem:[#allocation5 + $0x16c] sm:$0xff]
    %v118 = vld [vmem:[#allocation5 + $0x174] sm:$0xff]
    %v119 = vld [vmem:[#allocation5 + $0x17c] sm:$0xff]
    %v120 = vld [vmem:[#allocation5 + $0x184] sm:$0xf]
    %v121 = vld [vmem:[#allocation5 + $0x188] sm:$0xff]
    %v122 = vld [vmem:[#allocation5 + $0x190] sm:$0xff]
    %v123 = vld [vmem:[#allocation5 + $0x198] sm:$0xff]
    %v124 = vld [vmem:[#allocation5 + $0x1a0] sm:$0xf]
    %v125 = vld [vmem:[#allocation5 + $0x1a4] sm:$0xff]
    %v126 = vld [vmem:[#allocation5 + $0x1ac] sm:$0xff]
    %v127 = vld [vmem:[#allocation5 + $0x1b4] sm:$0xff]
    %v128 = vld [vmem:[#allocation5 + $0x1bc] sm:$0xf]
    %v129 = vld [vmem:[#allocation5 + $0x1c0] sm:$0xff]
    %v130 = vld [vmem:[#allocation5 + $0x1c8] sm:$0xff]
    %v131 = vld [vmem:[#allocation5 + $0x1d0] sm:$0xff]
    %v132 = vld [vmem:[#allocation5 + $0x1d8] sm:$0xf]
    %v133 = vld [vmem:[#allocation5 + $0x1dc] sm:$0xff]
    %v134 = vld [vmem:[#allocation5 + $0x1e4] sm:$0xff]
    %v135 = vld [vmem:[#allocation5 + $0x1ec] sm:$0xff]
    %v136 = vld [vmem:[#allocation5 + $0x1f4] sm:$0xf]
    %v137 = vld [vmem:[#allocation5 + $0x1f8] sm:$0xff]
    %v138 = vld [vmem:[#allocation5 + $0x200] sm:$0xff]
    %v139 = vld [vmem:[#allocation5 + $0x208] sm:$0xff]
    %v140 = vld [vmem:[#allocation5 + $0x210] sm:$0xf]
    %v141 = vld [vmem:[#allocation5 + $0x214] sm:$0xff]
    %v142 = vld [vmem:[#allocation5 + $0x21c] sm:$0xff]
    %v143 = vld [vmem:[#allocation5 + $0x224] sm:$0xff]
    %v144 = vld [vmem:[#allocation5 + $0x22c] sm:$0xf]
    %v145 = vld [vmem:[#allocation5 + $0x230] sm:$0xff]
    %v146 = vld [vmem:[#allocation5 + $0x238] sm:$0xff]
    %v147 = vld [vmem:[#allocation5 + $0x240] sm:$0xff]
    %v148 = vld [vmem:[#allocation5 + $0x248] sm:$0xf]
    %v149 = vld [vmem:[#allocation5 + $0x24c] sm:$0xff]
    %v150 = vld [vmem:[#allocation5 + $0x254] sm:$0xff]
    %v151 = vld [vmem:[#allocation5 + $0x25c] sm:$0xff]
    %v152 = vld [vmem:[#allocation5 + $0x264] sm:$0xf]
    %v153 = vld [vmem:[#allocation5 + $0x268] sm:$0xff]
    %v154 = vld [vmem:[#allocation5 + $0x270] sm:$0xff]
    %v155 = vld [vmem:[#allocation5 + $0x278] sm:$0xff]
    %v156 = vld [vmem:[#allocation5 + $0x280] sm:$0xf]
    %v157 = vld [vmem:[#allocation5 + $0x284] sm:$0xff]
    %v158 = vld [vmem:[#allocation5 + $0x28c] sm:$0xff]
    %v159 = vld [vmem:[#allocation5 + $0x294] sm:$0xff]
    %v160 = vld [vmem:[#allocation5 + $0x29c] sm:$0xf]
    %v161 = vld [vmem:[#allocation5 + $0x2a0] sm:$0xff]
    %v162 = vld [vmem:[#allocation5 + $0x2a8] sm:$0xff]
    %v163 = vld [vmem:[#allocation5 + $0x2b0] sm:$0xff]
    %v164 = vld [vmem:[#allocation5 + $0x2b8] sm:$0xf]
    %v165 = vld [vmem:[#allocation5 + $0x2bc] sm:$0xff]
    %v166 = vld [vmem:[#allocation5 + $0x2c4] sm:$0xff]
    %v167 = vld [vmem:[#allocation5 + $0x2cc] sm:$0xff]
    %v168 = vld [vmem:[#allocation5 + $0x2d4] sm:$0xf]
    %v169 = vld [vmem:[#allocation5 + $0x2d8] sm:$0xff]
    %v170 = vld [vmem:[#allocation5 + $0x2e0] sm:$0xff]
    %v171 = vld [vmem:[#allocation5 + $0x2e8] sm:$0xff]
    %v172 = vld [vmem:[#allocation5 + $0x2f0] sm:$0xf]
    %v173 = vld [vmem:[#allocation5 + $0x2f4] sm:$0xff]
    %v174 = vld [vmem:[#allocation5 + $0x2fc] sm:$0xff]
    %v175 = vld [vmem:[#allocation5 + $0x304] sm:$0xff]
    %v176 = vld [vmem:[#allocation5 + $0x30c] sm:$0xf]
    %v177 = vld [vmem:[#allocation5 + $0x310] sm:$0xff]
    %v178 = vld [vmem:[#allocation5 + $0x318] sm:$0xff]
    %v179 = vld [vmem:[#allocation5 + $0x320] sm:$0xff]
    %v180 = vld [vmem:[#allocation5 + $0x328] sm:$0xf]
    %v181 = vld [vmem:[#allocation5 + $0x32c] sm:$0xff]
    %v182 = vld [vmem:[#allocation5 + $0x334] sm:$0xff]
    %v183 = vld [vmem:[#allocation5 + $0x33c] sm:$0xff]
    %v184 = vld [vmem:[#allocation5 + $0x344] sm:$0xf]
    %v185 = vld [vmem:[#allocation5 + $0x348] sm:$0xff]
    %v186 = vld [vmem:[#allocation5 + $0x350] sm:$0xff]
    %v187 = vld [vmem:[#allocation5 + $0x358] sm:$0xff]
    %v188 = vld [vmem:[#allocation5 + $0x360] sm:$0xf]
    %v189 = vld [vmem:[#allocation5 + $0x364] sm:$0xff]
    %v190 = vld [vmem:[#allocation5 + $0x36c] sm:$0xff]
    %v191 = vld [vmem:[#allocation5 + $0x374] sm:$0xff]
    %v192 = vld [vmem:[#allocation5 + $0x37c] sm:$0xf]
    %v193 = vld [vmem:[%s2] sm:$0xff]
    %v195 = vlaneseq
    %v196 = vshrl.u32 %v195, 7
    %v197 = vsub.s32 0, %v196
    %v198 = vrot.slane %v193, %v197
    %v199 = vlaneseq
    %v200 = vshrl.u32 %v199, 7
    %v201 = vsub.s32 1, %v200
    %v202 = vrot.slane %v193, %v201
    %v203 = vlaneseq
    %v204 = vshrl.u32 %v203, 7
    %v205 = vsub.s32 2, %v204
    %v206 = vrot.slane %v193, %v205
    %v207 = vlaneseq
    %v208 = vshrl.u32 %v207, 7
    %v209 = vsub.s32 3, %v208
    %v210 = vrot.slane %v193, %v209
    %v211 = vlaneseq
    %v212 = vshrl.u32 %v211, 7
    %v213 = vsub.s32 4, %v212
    %v214 = vrot.slane %v193, %v213
    %v215 = vlaneseq
    %v216 = vshrl.u32 %v215, 7
    %v217 = vsub.s32 5, %v216
    %v218 = vrot.slane %v193, %v217
    %v219 = vlaneseq
    %v220 = vshrl.u32 %v219, 7
    %v221 = vsub.s32 6, %v220
    %v222 = vrot.slane %v193, %v221
    %v232 = vunpack.c.l.b16 %v63
    %v233 = vunpack.c.h.b16 %v63
    %v234 = vunpack.c.l.b16 %v64
    %v235 = vunpack.c.h.b16 %v64
    %v236 = vpack.c.b16 %v234, %v232
    %v237 = vpack.c.b16 %v235, %v233
    %v368 = vunpack.c.l.b16 %v65
    %v369 = vunpack.c.h.b16 %v65
    %v370 = vunpack.c.l.b16 %v66
    %v371 = vunpack.c.h.b16 %v66
    %v372 = vunpack.c.l.b16 %v67
    %v373 = vunpack.c.h.b16 %v67
    %v374 = vunpack.c.l.b16 %v68
    %v375 = vunpack.c.l.b16 %v69
    %v376 = vunpack.c.h.b16 %v69
    %v377 = vunpack.c.l.b16 %v70
    %v378 = vunpack.c.h.b16 %v70
    %v379 = vunpack.c.l.b16 %v71
    %v380 = vunpack.c.h.b16 %v71
    %v381 = vunpack.c.l.b16 %v72
    %v382 = vunpack.c.l.b16 %v73
    %v383 = vunpack.c.h.b16 %v73
    %v384 = vunpack.c.l.b16 %v74
    %v385 = vunpack.c.h.b16 %v74
    %v386 = vunpack.c.l.b16 %v75
    %v387 = vunpack.c.h.b16 %v75
    %v388 = vunpack.c.l.b16 %v76
    %v389 = vunpack.c.l.b16 %v77
    %v390 = vunpack.c.h.b16 %v77
    %v391 = vunpack.c.l.b16 %v78
    %v392 = vunpack.c.h.b16 %v78
    %v393 = vunpack.c.l.b16 %v79
    %v394 = vunpack.c.h.b16 %v79
    %v395 = vunpack.c.l.b16 %v80
    %v396 = vunpack.c.l.b16 %v81
    %v397 = vunpack.c.h.b16 %v81
    %v398 = vunpack.c.l.b16 %v82
    %v399 = vunpack.c.h.b16 %v82
    %v400 = vunpack.c.l.b16 %v83
    %v401 = vunpack.c.h.b16 %v83
    %v402 = vunpack.c.l.b16 %v84
    %v403 = vunpack.c.l.b16 %v85
    %v404 = vunpack.c.h.b16 %v85
    %v405 = vunpack.c.l.b16 %v86
    %v406 = vunpack.c.h.b16 %v86
    %v407 = vunpack.c.l.b16 %v87
    %v408 = vunpack.c.h.b16 %v87
    %v409 = vunpack.c.l.b16 %v88
    %v410 = vunpack.c.l.b16 %v89
    %v411 = vunpack.c.h.b16 %v89
    %v412 = vunpack.c.l.b16 %v90
    %v413 = vunpack.c.h.b16 %v90
    %v414 = vunpack.c.l.b16 %v91
    %v415 = vunpack.c.h.b16 %v91
    %v416 = vunpack.c.l.b16 %v92
    %v417 = vunpack.c.l.b16 %v93
    %v418 = vunpack.c.h.b16 %v93
    %v419 = vunpack.c.l.b16 %v94
    %v420 = vunpack.c.h.b16 %v94
    %v421 = vunpack.c.l.b16 %v95
    %v422 = vunpack.c.h.b16 %v95
    %v423 = vunpack.c.l.b16 %v96
    %v424 = vunpack.c.l.b16 %v97
    %v425 = vunpack.c.h.b16 %v97
    %v426 = vunpack.c.l.b16 %v98
    %v427 = vunpack.c.h.b16 %v98
    %v428 = vunpack.c.l.b16 %v99
    %v429 = vunpack.c.h.b16 %v99
    %v430 = vunpack.c.l.b16 %v100
    %v431 = vunpack.c.l.b16 %v101
    %v432 = vunpack.c.h.b16 %v101
    %v433 = vunpack.c.l.b16 %v102
    %v434 = vunpack.c.h.b16 %v102
    %v435 = vunpack.c.l.b16 %v103
    %v436 = vunpack.c.h.b16 %v103
    %v437 = vunpack.c.l.b16 %v104
    %v438 = vunpack.c.l.b16 %v105
    %v439 = vunpack.c.h.b16 %v105
    %v440 = vunpack.c.l.b16 %v106
    %v441 = vunpack.c.h.b16 %v106
    %v442 = vunpack.c.l.b16 %v107
    %v443 = vunpack.c.h.b16 %v107
    %v444 = vunpack.c.l.b16 %v108
    %v445 = vunpack.c.l.b16 %v109
    %v446 = vunpack.c.h.b16 %v109
    %v447 = vunpack.c.l.b16 %v110
    %v448 = vunpack.c.h.b16 %v110
    %v449 = vunpack.c.l.b16 %v111
    %v450 = vunpack.c.h.b16 %v111
    %v451 = vunpack.c.l.b16 %v112
    %v452 = vunpack.c.l.b16 %v113
    %v453 = vunpack.c.h.b16 %v113
    %v454 = vunpack.c.l.b16 %v114
    %v455 = vunpack.c.h.b16 %v114
    %v456 = vunpack.c.l.b16 %v115
    %v457 = vunpack.c.h.b16 %v115
    %v458 = vunpack.c.l.b16 %v116
    %v459 = vunpack.c.l.b16 %v117
    %v460 = vunpack.c.h.b16 %v117
    %v461 = vunpack.c.l.b16 %v118
    %v462 = vunpack.c.h.b16 %v118
    %v463 = vunpack.c.l.b16 %v119
    %v464 = vunpack.c.h.b16 %v119
    %v465 = vunpack.c.l.b16 %v120
    %v466 = vunpack.c.l.b16 %v121
    %v467 = vunpack.c.h.b16 %v121
    %v468 = vunpack.c.l.b16 %v122
    %v469 = vunpack.c.h.b16 %v122
    %v470 = vunpack.c.l.b16 %v123
    %v471 = vunpack.c.h.b16 %v123
    %v472 = vunpack.c.l.b16 %v124
    %v473 = vunpack.c.l.b16 %v125
    %v474 = vunpack.c.h.b16 %v125
    %v475 = vunpack.c.l.b16 %v126
    %v476 = vunpack.c.h.b16 %v126
    %v477 = vunpack.c.l.b16 %v127
    %v478 = vunpack.c.h.b16 %v127
    %v479 = vunpack.c.l.b16 %v128
    %v480 = vunpack.c.l.b16 %v129
    %v481 = vunpack.c.h.b16 %v129
    %v482 = vunpack.c.l.b16 %v130
    %v483 = vunpack.c.h.b16 %v130
    %v484 = vunpack.c.l.b16 %v131
    %v485 = vunpack.c.h.b16 %v131
    %v486 = vunpack.c.l.b16 %v132
    %v487 = vunpack.c.l.b16 %v133
    %v488 = vunpack.c.h.b16 %v133
    %v489 = vunpack.c.l.b16 %v134
    %v490 = vunpack.c.h.b16 %v134
    %v491 = vunpack.c.l.b16 %v135
    %v492 = vunpack.c.h.b16 %v135
    %v493 = vunpack.c.l.b16 %v136
    %v494 = vunpack.c.l.b16 %v137
    %v495 = vunpack.c.h.b16 %v137
    %v496 = vunpack.c.l.b16 %v138
    %v497 = vunpack.c.h.b16 %v138
    %v498 = vunpack.c.l.b16 %v139
    %v499 = vunpack.c.h.b16 %v139
    %v500 = vunpack.c.l.b16 %v140
    %v501 = vunpack.c.l.b16 %v141
    %v502 = vunpack.c.h.b16 %v141
    %v503 = vunpack.c.l.b16 %v142
    %v504 = vunpack.c.h.b16 %v142
    %v505 = vunpack.c.l.b16 %v143
    %v506 = vunpack.c.h.b16 %v143
    %v507 = vunpack.c.l.b16 %v144
    %v508 = vunpack.c.l.b16 %v145
    %v509 = vunpack.c.h.b16 %v145
    %v510 = vunpack.c.l.b16 %v146
    %v511 = vunpack.c.h.b16 %v146
    %v512 = vunpack.c.l.b16 %v147
    %v513 = vunpack.c.h.b16 %v147
    %v514 = vunpack.c.l.b16 %v148
    %v515 = vunpack.c.l.b16 %v149
    %v516 = vunpack.c.h.b16 %v149
    %v517 = vunpack.c.l.b16 %v150
    %v518 = vunpack.c.h.b16 %v150
    %v519 = vunpack.c.l.b16 %v151
    %v520 = vunpack.c.h.b16 %v151
    %v521 = vunpack.c.l.b16 %v152
    %v522 = vunpack.c.l.b16 %v153
    %v523 = vunpack.c.h.b16 %v153
    %v524 = vunpack.c.l.b16 %v154
    %v525 = vunpack.c.h.b16 %v154
    %v526 = vunpack.c.l.b16 %v155
    %v527 = vunpack.c.h.b16 %v155
    %v528 = vunpack.c.l.b16 %v156
    %v529 = vunpack.c.l.b16 %v157
    %v530 = vunpack.c.h.b16 %v157
    %v531 = vunpack.c.l.b16 %v158
    %v532 = vunpack.c.h.b16 %v158
    %v533 = vunpack.c.l.b16 %v159
    %v534 = vunpack.c.h.b16 %v159
    %v535 = vunpack.c.l.b16 %v160
    %v536 = vunpack.c.l.b16 %v161
    %v537 = vunpack.c.h.b16 %v161
    %v538 = vunpack.c.l.b16 %v162
    %v539 = vunpack.c.h.b16 %v162
    %v540 = vunpack.c.l.b16 %v163
    %v541 = vunpack.c.h.b16 %v163
    %v542 = vunpack.c.l.b16 %v164
    %v543 = vunpack.c.l.b16 %v165
    %v544 = vunpack.c.h.b16 %v165
    %v545 = vunpack.c.l.b16 %v166
    %v546 = vunpack.c.h.b16 %v166
    %v547 = vunpack.c.l.b16 %v167
    %v548 = vunpack.c.h.b16 %v167
    %v549 = vunpack.c.l.b16 %v168
    %v550 = vunpack.c.l.b16 %v169
    %v551 = vunpack.c.h.b16 %v169
    %v552 = vunpack.c.l.b16 %v170
    %v553 = vunpack.c.h.b16 %v170
    %v554 = vunpack.c.l.b16 %v171
    %v555 = vunpack.c.h.b16 %v171
    %v556 = vunpack.c.l.b16 %v172
    %v557 = vunpack.c.l.b16 %v173
    %v558 = vunpack.c.h.b16 %v173
    %v559 = vunpack.c.l.b16 %v174
    %v560 = vunpack.c.h.b16 %v174
    %v561 = vunpack.c.l.b16 %v175
    %v562 = vunpack.c.h.b16 %v175
    %v563 = vunpack.c.l.b16 %v176
    %v564 = vunpack.c.l.b16 %v177
    %v565 = vunpack.c.h.b16 %v177
    %v566 = vunpack.c.l.b16 %v178
    %v567 = vunpack.c.h.b16 %v178
    %v568 = vunpack.c.l.b16 %v179
    %v569 = vunpack.c.h.b16 %v179
    %v570 = vunpack.c.l.b16 %v180
    %v571 = vunpack.c.l.b16 %v181
    %v572 = vunpack.c.h.b16 %v181
    %v573 = vunpack.c.l.b16 %v182
    %v574 = vunpack.c.h.b16 %v182
    %v575 = vunpack.c.l.b16 %v183
    %v576 = vunpack.c.h.b16 %v183
    %v577 = vunpack.c.l.b16 %v184
    %v578 = vunpack.c.l.b16 %v185
    %v579 = vunpack.c.h.b16 %v185
    %v580 = vunpack.c.l.b16 %v186
    %v581 = vunpack.c.h.b16 %v186
    %v582 = vunpack.c.l.b16 %v187
    %v583 = vunpack.c.h.b16 %v187
    %v584 = vunpack.c.l.b16 %v188
    %v585 = vunpack.c.l.b16 %v189
    %v586 = vunpack.c.h.b16 %v189
    %v587 = vunpack.c.l.b16 %v190
    %v588 = vunpack.c.h.b16 %v190
    %v589 = vunpack.c.l.b16 %v191
    %v590 = vunpack.c.h.b16 %v191
    %v591 = vunpack.c.l.b16 %v192
    %v592 = vpack.c.b16 %v375, %v368
    %v593 = vpack.c.b16 %v376, %v369
    %v594 = vpack.c.b16 %v377, %v370
    %v595 = vpack.c.b16 %v378, %v371
    %v596 = vpack.c.b16 %v379, %v372
    %v597 = vpack.c.b16 %v380, %v373
    %v598 = vpack.c.b16 %v381, %v374
    %v599 = vpack.c.b16 %v389, %v382
    %v600 = vpack.c.b16 %v390, %v383
    %v601 = vpack.c.b16 %v391, %v384
    %v602 = vpack.c.b16 %v392, %v385
    %v603 = vpack.c.b16 %v393, %v386
    %v604 = vpack.c.b16 %v394, %v387
    %v605 = vpack.c.b16 %v395, %v388
    %v606 = vpack.c.b16 %v403, %v396
    %v607 = vpack.c.b16 %v404, %v397
    %v608 = vpack.c.b16 %v405, %v398
    %v609 = vpack.c.b16 %v406, %v399
    %v610 = vpack.c.b16 %v407, %v400
    %v611 = vpack.c.b16 %v408, %v401
    %v612 = vpack.c.b16 %v409, %v402
    %v613 = vpack.c.b16 %v417, %v410
    %v614 = vpack.c.b16 %v418, %v411
    %v615 = vpack.c.b16 %v419, %v412
    %v616 = vpack.c.b16 %v420, %v413
    %v617 = vpack.c.b16 %v421, %v414
    %v618 = vpack.c.b16 %v422, %v415
    %v619 = vpack.c.b16 %v423, %v416
    %v620 = vpack.c.b16 %v431, %v424
    %v621 = vpack.c.b16 %v432, %v425
    %v622 = vpack.c.b16 %v433, %v426
    %v623 = vpack.c.b16 %v434, %v427
    %v624 = vpack.c.b16 %v435, %v428
    %v625 = vpack.c.b16 %v436, %v429
    %v626 = vpack.c.b16 %v437, %v430
    %v627 = vpack.c.b16 %v445, %v438
    %v628 = vpack.c.b16 %v446, %v439
    %v629 = vpack.c.b16 %v447, %v440
    %v630 = vpack.c.b16 %v448, %v441
    %v631 = vpack.c.b16 %v449, %v442
    %v632 = vpack.c.b16 %v450, %v443
    %v633 = vpack.c.b16 %v451, %v444
    %v634 = vpack.c.b16 %v459, %v452
    %v635 = vpack.c.b16 %v460, %v453
    %v636 = vpack.c.b16 %v461, %v454
    %v637 = vpack.c.b16 %v462, %v455
    %v638 = vpack.c.b16 %v463, %v456
    %v639 = vpack.c.b16 %v464, %v457
    %v640 = vpack.c.b16 %v465, %v458
    %v641 = vpack.c.b16 %v473, %v466
    %v642 = vpack.c.b16 %v474, %v467
    %v643 = vpack.c.b16 %v475, %v468
    %v644 = vpack.c.b16 %v476, %v469
    %v645 = vpack.c.b16 %v477, %v470
    %v646 = vpack.c.b16 %v478, %v471
    %v647 = vpack.c.b16 %v479, %v472
    %v648 = vpack.c.b16 %v487, %v480
    %v649 = vpack.c.b16 %v488, %v481
    %v650 = vpack.c.b16 %v489, %v482
    %v651 = vpack.c.b16 %v490, %v483
    %v652 = vpack.c.b16 %v491, %v484
    %v653 = vpack.c.b16 %v492, %v485
    %v654 = vpack.c.b16 %v493, %v486
    %v655 = vpack.c.b16 %v501, %v494
    %v656 = vpack.c.b16 %v502, %v495
    %v657 = vpack.c.b16 %v503, %v496
    %v658 = vpack.c.b16 %v504, %v497
    %v659 = vpack.c.b16 %v505, %v498
    %v660 = vpack.c.b16 %v506, %v499
    %v661 = vpack.c.b16 %v507, %v500
    %v662 = vpack.c.b16 %v515, %v508
    %v663 = vpack.c.b16 %v516, %v509
    %v664 = vpack.c.b16 %v517, %v510
    %v665 = vpack.c.b16 %v518, %v511
    %v666 = vpack.c.b16 %v519, %v512
    %v667 = vpack.c.b16 %v520, %v513
    %v668 = vpack.c.b16 %v521, %v514
    %v669 = vpack.c.b16 %v529, %v522
    %v670 = vpack.c.b16 %v530, %v523
    %v671 = vpack.c.b16 %v531, %v524
    %v672 = vpack.c.b16 %v532, %v525
    %v673 = vpack.c.b16 %v533, %v526
    %v674 = vpack.c.b16 %v534, %v527
    %v675 = vpack.c.b16 %v535, %v528
    %v676 = vpack.c.b16 %v543, %v536
    %v677 = vpack.c.b16 %v544, %v537
    %v678 = vpack.c.b16 %v545, %v538
    %v679 = vpack.c.b16 %v546, %v539
    %v680 = vpack.c.b16 %v547, %v540
    %v681 = vpack.c.b16 %v548, %v541
    %v682 = vpack.c.b16 %v549, %v542
    %v683 = vpack.c.b16 %v557, %v550
    %v684 = vpack.c.b16 %v558, %v551
    %v685 = vpack.c.b16 %v559, %v552
    %v686 = vpack.c.b16 %v560, %v553
    %v687 = vpack.c.b16 %v561, %v554
    %v688 = vpack.c.b16 %v562, %v555
    %v689 = vpack.c.b16 %v563, %v556
    %v690 = vpack.c.b16 %v571, %v564
    %v691 = vpack.c.b16 %v572, %v565
    %v692 = vpack.c.b16 %v573, %v566
    %v693 = vpack.c.b16 %v574, %v567
    %v694 = vpack.c.b16 %v575, %v568
    %v695 = vpack.c.b16 %v576, %v569
    %v696 = vpack.c.b16 %v577, %v570
    %v697 = vpack.c.b16 %v585, %v578
    %v698 = vpack.c.b16 %v586, %v579
    %v699 = vpack.c.b16 %v587, %v580
    %v700 = vpack.c.b16 %v588, %v581
    %v701 = vpack.c.b16 %v589, %v582
    %v702 = vpack.c.b16 %v590, %v583
    %v703 = vpack.c.b16 %v591, %v584
    %816 = vmatprep.subr.bf16.mxu0 %v593
    %817 = vmatpush1.bf16.msra.mxu0 %v592
    %818 = vmatprep.subr.bf16.mxu0 %v600
    %819 = vmatpush1.bf16.msra.mxu0 %v599
    %820 = vmatprep.subr.bf16.mxu0 %v607
    %821 = vmatpush1.bf16.msra.mxu0 %v606
    %822 = vmatprep.subr.bf16.mxu0 %v614
    %823 = vmatpush1.bf16.msra.mxu0 %v613
    %824 = vmatprep.subr.bf16.mxu0 %v621
    %825 = vmatpush1.bf16.msra.mxu0 %v620
    %826 = vmatprep.subr.bf16.mxu0 %v628
    %827 = vmatpush1.bf16.msra.mxu0 %v627
    %828 = vmatprep.subr.bf16.mxu0 %v635
    %829 = vmatpush1.bf16.msra.mxu0 %v634
    %830 = vmatprep.subr.bf16.mxu0 %v642
    %831 = vmatpush1.bf16.msra.mxu0 %v641
    %832 = vmatprep.subr.bf16.mxu0 %v649
    %833 = vmatpush1.bf16.msra.mxu0 %v648
    %834 = vmatprep.subr.bf16.mxu0 %v656
    %835 = vmatpush1.bf16.msra.mxu0 %v655
    %836 = vmatprep.subr.bf16.mxu0 %v663
    %837 = vmatpush1.bf16.msra.mxu0 %v662
    %838 = vmatprep.subr.bf16.mxu0 %v670
    %839 = vmatpush1.bf16.msra.mxu0 %v669
    %840 = vmatprep.subr.bf16.mxu0 %v677
    %841 = vmatpush1.bf16.msra.mxu0 %v676
    %842 = vmatprep.subr.bf16.mxu0 %v684
    %843 = vmatpush1.bf16.msra.mxu0 %v683
    %844 = vmatprep.subr.bf16.mxu0 %v691
    %845 = vmatpush1.bf16.msra.mxu0 %v690
    %846 = vmatprep.subr.bf16.mxu0 %v698
    %847 = vmatpush1.bf16.msra.mxu0 %v697
    %848 = vmatprep.mubr.bf16.mxu0 %v237
    %849 = vmatmul.mubr.bf16.gmra.mrb[0].mxu0 %v236
    %v850 = vpop.f32.mrb[0].mxu0
    %v851 = vadd.f32 %v198, %v850
    %v852 = vpop.f32.mrb[0].mxu0
    %v853 = vadd.f32 %v202, %v852
    %v854 = vpop.f32.mrb[0].mxu0
    %v855 = vadd.f32 %v198, %v854
    %v856 = vpop.f32.mrb[0].mxu0
    %v857 = vadd.f32 %v202, %v856
    %858 = vdwg.mxu0
    %859 = vmatprep.subr.bf16.mxu0 %v595
    %860 = vmatpush1.bf16.msra.mxu0 %v594
    %861 = vmatprep.subr.bf16.mxu0 %v602
    %862 = vmatpush1.bf16.msra.mxu0 %v601
    %863 = vmatprep.subr.bf16.mxu0 %v609
    %864 = vmatpush1.bf16.msra.mxu0 %v608
    %865 = vmatprep.subr.bf16.mxu0 %v616
    %866 = vmatpush1.bf16.msra.mxu0 %v615
    %867 = vmatprep.subr.bf16.mxu0 %v623
    %868 = vmatpush1.bf16.msra.mxu0 %v622
    %869 = vmatprep.subr.bf16.mxu0 %v630
    %870 = vmatpush1.bf16.msra.mxu0 %v629
    %871 = vmatprep.subr.bf16.mxu0 %v637
    %872 = vmatpush1.bf16.msra.mxu0 %v636
    %873 = vmatprep.subr.bf16.mxu0 %v644
    %874 = vmatpush1.bf16.msra.mxu0 %v643
    %875 = vmatprep.subr.bf16.mxu0 %v651
    %876 = vmatpush1.bf16.msra.mxu0 %v650
    %877 = vmatprep.subr.bf16.mxu0 %v658
    %878 = vmatpush1.bf16.msra.mxu0 %v657
    %879 = vmatprep.subr.bf16.mxu0 %v665
    %880 = vmatpush1.bf16.msra.mxu0 %v664
    %881 = vmatprep.subr.bf16.mxu0 %v672
    %882 = vmatpush1.bf16.msra.mxu0 %v671
    %883 = vmatprep.subr.bf16.mxu0 %v679
    %884 = vmatpush1.bf16.msra.mxu0 %v678
    %885 = vmatprep.subr.bf16.mxu0 %v686
    %886 = vmatpush1.bf16.msra.mxu0 %v685
    %887 = vmatprep.subr.bf16.mxu0 %v693
    %888 = vmatpush1.bf16.msra.mxu0 %v692
    %889 = vmatprep.subr.bf16.mxu0 %v700
    %890 = vmatpush1.bf16.msra.mxu0 %v699
    %891 = vmatprep.mubr.bf16.mxu0 %v237
    %892 = vmatmul.mubr.bf16.gmra.mrb[0].mxu0 %v236
    %v893 = vpop.f32.mrb[0].mxu0
    %v894 = vadd.f32 %v206, %v893
    %v895 = vpop.f32.mrb[0].mxu0
    %v896 = vadd.f32 %v210, %v895
    %v897 = vpop.f32.mrb[0].mxu0
    %v898 = vadd.f32 %v206, %v897
    %v899 = vpop.f32.mrb[0].mxu0
    %v900 = vadd.f32 %v210, %v899
    %901 = vdwg.mxu0
    %902 = vmatprep.subr.bf16.mxu0 %v597
    %903 = vmatpush1.bf16.msra.mxu0 %v596
    %904 = vmatprep.subr.bf16.mxu0 %v604
    %905 = vmatpush1.bf16.msra.mxu0 %v603
    %906 = vmatprep.subr.bf16.mxu0 %v611
    %907 = vmatpush1.bf16.msra.mxu0 %v610
    %908 = vmatprep.subr.bf16.mxu0 %v618
    %909 = vmatpush1.bf16.msra.mxu0 %v617
    %910 = vmatprep.subr.bf16.mxu0 %v625
    %911 = vmatpush1.bf16.msra.mxu0 %v624
    %912 = vmatprep.subr.bf16.mxu0 %v632
    %913 = vmatpush1.bf16.msra.mxu0 %v631
    %914 = vmatprep.subr.bf16.mxu0 %v639
    %915 = vmatpush1.bf16.msra.mxu0 %v638
    %916 = vmatprep.subr.bf16.mxu0 %v646
    %917 = vmatpush1.bf16.msra.mxu0 %v645
    %918 = vmatprep.subr.bf16.mxu0 %v653
    %919 = vmatpush1.bf16.msra.mxu0 %v652
    %920 = vmatprep.subr.bf16.mxu0 %v660
    %921 = vmatpush1.bf16.msra.mxu0 %v659
    %922 = vmatprep.subr.bf16.mxu0 %v667
    %923 = vmatpush1.bf16.msra.mxu0 %v666
    %924 = vmatprep.subr.bf16.mxu0 %v674
    %925 = vmatpush1.bf16.msra.mxu0 %v673
    %926 = vmatprep.subr.bf16.mxu0 %v681
    %927 = vmatpush1.bf16.msra.mxu0 %v680
    %928 = vmatprep.subr.bf16.mxu0 %v688
    %929 = vmatpush1.bf16.msra.mxu0 %v687
    %930 = vmatprep.subr.bf16.mxu0 %v695
    %931 = vmatpush1.bf16.msra.mxu0 %v694
    %932 = vmatprep.subr.bf16.mxu0 %v702
    %933 = vmatpush1.bf16.msra.mxu0 %v701
    %934 = vmatprep.mubr.bf16.mxu0 %v237
    %935 = vmatmul.mubr.bf16.gmra.mrb[0].mxu0 %v236
    %v936 = vpop.f32.mrb[0].mxu0
    %v937 = vadd.f32 %v214, %v936
    %v938 = vpop.f32.mrb[0].mxu0
    %v939 = vadd.f32 %v218, %v938
    %v940 = vpop.f32.mrb[0].mxu0
    %v941 = vadd.f32 %v214, %v940
    %v942 = vpop.f32.mrb[0].mxu0
    %v943 = vadd.f32 %v218, %v942
    %944 = vdwg.mxu0
    %945 = vmatprep.subr.bf16.mxu0 0
    %946 = vmatpush1.bf16.msra.mxu0 %v598
    %947 = vmatprep.subr.bf16.mxu0 0
    %948 = vmatpush1.bf16.msra.mxu0 %v605
    %949 = vmatprep.subr.bf16.mxu0 0
    %950 = vmatpush1.bf16.msra.mxu0 %v612
    %951 = vmatprep.subr.bf16.mxu0 0
    %952 = vmatpush1.bf16.msra.mxu0 %v619
    %953 = vmatprep.subr.bf16.mxu0 0
    %954 = vmatpush1.bf16.msra.mxu0 %v626
    %955 = vmatprep.subr.bf16.mxu0 0
    %956 = vmatpush1.bf16.msra.mxu0 %v633
    %957 = vmatprep.subr.bf16.mxu0 0
    %958 = vmatpush1.bf16.msra.mxu0 %v640
    %959 = vmatprep.subr.bf16.mxu0 0
    %960 = vmatpush1.bf16.msra.mxu0 %v647
    %961 = vmatprep.subr.bf16.mxu0 0
    %962 = vmatpush1.bf16.msra.mxu0 %v654
    %963 = vmatprep.subr.bf16.mxu0 0
    %964 = vmatpush1.bf16.msra.mxu0 %v661
    %965 = vmatprep.subr.bf16.mxu0 0
    %966 = vmatpush1.bf16.msra.mxu0 %v668
    %967 = vmatprep.subr.bf16.mxu0 0
    %968 = vmatpush1.bf16.msra.mxu0 %v675
    %969 = vmatprep.subr.bf16.mxu0 0
    %970 = vmatpush1.bf16.msra.mxu0 %v682
    %971 = vmatprep.subr.bf16.mxu0 0
    %972 = vmatpush1.bf16.msra.mxu0 %v689
    %973 = vmatprep.subr.bf16.mxu0 0
    %974 = vmatpush1.bf16.msra.mxu0 %v696
    %975 = vmatprep.subr.bf16.mxu0 0
    %976 = vmatpush1.bf16.msra.mxu0 %v703
    %977 = vmatprep.mubr.bf16.mxu0 %v237
    %978 = vmatmul.mubr.bf16.gmra.mrb[0].mxu0 %v236
    %v979 = vpop.f32.mrb[0].mxu0
    %v980 = vadd.f32 %v222, %v979
    %v981 = vpop.f32.mrb[0].mxu0
    %v982 = vpop.f32.mrb[0].mxu0
    %v983 = vadd.f32 %v222, %v982
    %v984 = vpop.f32.mrb[0].mxu0
    %985 = vdwg.mxu0
    %v986 = vmul.f32 %v851, 0.5
    %v987 = vmul.f32 %v853, 0.5
    %v988 = vmul.f32 %v894, 0.5
    %v989 = vmul.f32 %v896, 0.5
    %v990 = vmul.f32 %v937, 0.5
    %v991 = vmul.f32 %v939, 0.5
    %v992 = vmul.f32 %v980, 0.5
    %v993 = vmul.f32 %v855, 0.5
    %v994 = vmul.f32 %v857, 0.5
    %v995 = vmul.f32 %v898, 0.5
    %v996 = vmul.f32 %v900, 0.5
    %v997 = vmul.f32 %v941, 0.5
    %v998 = vmul.f32 %v943, 0.5
    %v999 = vmul.f32 %v983, 0.5
    %v1000 = vmul.f32 %v851, 0.70710677
    %v1001 = vmul.f32 %v853, 0.70710677
    %v1002 = vmul.f32 %v894, 0.70710677
    %v1003 = vmul.f32 %v896, 0.70710677
    %v1004 = vmul.f32 %v937, 0.70710677
    %v1005 = vmul.f32 %v939, 0.70710677
    %v1006 = vmul.f32 %v980, 0.70710677
    %v1007 = vmul.f32 %v855, 0.70710677
    %v1008 = vmul.f32 %v857, 0.70710677
    %v1009 = vmul.f32 %v898, 0.70710677
    %v1010 = vmul.f32 %v900, 0.70710677
    %v1011 = vmul.f32 %v941, 0.70710677
    %v1012 = vmul.f32 %v943, 0.70710677
    %v1013 = vmul.f32 %v983, 0.70710677
    %v1014 = verf.f32.pop %v1000
    %v1015 = verf.f32.pop %v1001
    %v1016 = verf.f32.pop %v1002
    %v1017 = verf.f32.pop %v1003
    %v1018 = verf.f32.pop %v1004
    %v1019 = verf.f32.pop %v1005
    %v1020 = verf.f32.pop %v1006
    %v1021 = verf.f32.pop %v1007
    %v1022 = verf.f32.pop %v1008
    %v1023 = verf.f32.pop %v1009
    %v1024 = verf.f32.pop %v1010
    %v1025 = verf.f32.pop %v1011
    %v1026 = verf.f32.pop %v1012
    %v1027 = verf.f32.pop %v1013
    %v1028 = vadd.f32 %v1014, 1.0
    %v1029 = vadd.f32 %v1015, 1.0
    %v1030 = vadd.f32 %v1016, 1.0
    %v1031 = vadd.f32 %v1017, 1.0
    %v1032 = vadd.f32 %v1018, 1.0
    %v1033 = vadd.f32 %v1019, 1.0
    %v1034 = vadd.f32 %v1020, 1.0
    %v1035 = vadd.f32 %v1021, 1.0
    %v1036 = vadd.f32 %v1022, 1.0
    %v1037 = vadd.f32 %v1023, 1.0
    %v1038 = vadd.f32 %v1024, 1.0
    %v1039 = vadd.f32 %v1025, 1.0
    %v1040 = vadd.f32 %v1026, 1.0
    %v1041 = vadd.f32 %v1027, 1.0
    %v1042 = vmul.f32 %v986, %v1028
    %v1043 = vmul.f32 %v987, %v1029
    %v1044 = vmul.f32 %v988, %v1030
    %v1045 = vmul.f32 %v989, %v1031
    %v1046 = vmul.f32 %v990, %v1032
    %v1047 = vmul.f32 %v991, %v1033
    %v1048 = vmul.f32 %v992, %v1034
    %v1049 = vmul.f32 %v993, %v1035
    %v1050 = vmul.f32 %v994, %v1036
    %v1051 = vmul.f32 %v995, %v1037
    %v1052 = vmul.f32 %v996, %v1038
    %v1053 = vmul.f32 %v997, %v1039
    %v1054 = vmul.f32 %v998, %v1040
    %v1055 = vmul.f32 %v999, %v1041
    %v1056 = vpack.c.bf16 %v1049, %v1042
    %v1057 = vpack.c.bf16 %v1050, %v1043
    %v1058 = vpack.c.bf16 %v1051, %v1044
    %v1059 = vpack.c.bf16 %v1052, %v1045
    %v1060 = vpack.c.bf16 %v1053, %v1046
    %v1061 = vpack.c.bf16 %v1054, %v1047
    %v1062 = vpack.c.bf16 %v1055, %v1048
    %v1063 = vld [vmem:[#allocation7] sm:$0xff]
    %v1064 = vld [vmem:[#allocation7 + $0x8] sm:$0xff]
    %v1065 = vld [vmem:[#allocation7 + $0x10] sm:$0xff]
    %v1066 = vld [vmem:[#allocation7 + $0x18] sm:$0xff]
    %v1067 = vld [vmem:[#allocation7 + $0x20] sm:$0xff]
    %v1068 = vld [vmem:[#allocation7 + $0x28] sm:$0xff]
    %v1069 = vld [vmem:[#allocation7 + $0x30] sm:$0xff]
    %v1070 = vld [vmem:[#allocation7 + $0x38] sm:$0xff]
    %v1071 = vld [vmem:[#allocation7 + $0x40] sm:$0xff]
    %v1072 = vld [vmem:[#allocation7 + $0x48] sm:$0xff]
    %v1073 = vld [vmem:[#allocation7 + $0x50] sm:$0xff]
    %v1074 = vld [vmem:[#allocation7 + $0x58] sm:$0xff]
    %v1075 = vld [vmem:[#allocation7 + $0x60] sm:$0xff]
    %v1076 = vld [vmem:[#allocation7 + $0x68] sm:$0xff]
    %v1077 = vld [vmem:[#allocation7 + $0x70] sm:$0xff]
    %v1078 = vld [vmem:[#allocation7 + $0x78] sm:$0xff]
    %v1079 = vld [vmem:[#allocation7 + $0x80] sm:$0xff]
    %v1080 = vld [vmem:[#allocation7 + $0x88] sm:$0xff]
    %v1081 = vld [vmem:[#allocation7 + $0x90] sm:$0xff]
    %v1082 = vld [vmem:[#allocation7 + $0x98] sm:$0xff]
    %v1083 = vld [vmem:[#allocation7 + $0xa0] sm:$0xff]
    %v1084 = vld [vmem:[#allocation7 + $0xa8] sm:$0xff]
    %v1085 = vld [vmem:[#allocation7 + $0xb0] sm:$0xff]
    %v1086 = vld [vmem:[#allocation7 + $0xb8] sm:$0xff]
    %v1087 = vld [vmem:[#allocation7 + $0xc0] sm:$0xff]
    %v1088 = vld [vmem:[#allocation7 + $0xc8] sm:$0xff]
    %v1089 = vld [vmem:[#allocation7 + $0xd0] sm:$0xff]
    %v1090 = vld [vmem:[#allocation7 + $0xd8] sm:$0xff]
    %v1091 = vld [vmem:[#allocation7 + $0xe0] sm:$0xff]
    %v1092 = vld [vmem:[#allocation7 + $0xe8] sm:$0xff]
    %v1093 = vld [vmem:[#allocation7 + $0xf0] sm:$0xff]
    %v1094 = vld [vmem:[#allocation7 + $0xf8] sm:$0xff]
    %v1095 = vld [vmem:[#allocation7 + $0x100] sm:$0xff]
    %v1096 = vld [vmem:[#allocation7 + $0x108] sm:$0xff]
    %v1097 = vld [vmem:[#allocation7 + $0x110] sm:$0xff]
    %v1098 = vld [vmem:[#allocation7 + $0x118] sm:$0xff]
    %v1099 = vld [vmem:[#allocation7 + $0x120] sm:$0xff]
    %v1100 = vld [vmem:[#allocation7 + $0x128] sm:$0xff]
    %v1101 = vld [vmem:[#allocation7 + $0x130] sm:$0xff]
    %v1102 = vld [vmem:[#allocation7 + $0x138] sm:$0xff]
    %v1103 = vld [vmem:[#allocation7 + $0x140] sm:$0xff]
    %v1104 = vld [vmem:[#allocation7 + $0x148] sm:$0xff]
    %v1105 = vld [vmem:[#allocation7 + $0x150] sm:$0xff]
    %v1106 = vld [vmem:[#allocation7 + $0x158] sm:$0xff]
    %v1107 = vld [vmem:[#allocation7 + $0x160] sm:$0xff]
    %v1108 = vld [vmem:[#allocation7 + $0x168] sm:$0xff]
    %v1109 = vld [vmem:[#allocation7 + $0x170] sm:$0xff]
    %v1110 = vld [vmem:[#allocation7 + $0x178] sm:$0xff]
    %v1111 = vld [vmem:[#allocation7 + $0x180] sm:$0xff]
    %v1112 = vld [vmem:[#allocation7 + $0x188] sm:$0xff]
    %v1113 = vld [vmem:[#allocation7 + $0x190] sm:$0xff]
    %v1114 = vld [vmem:[#allocation7 + $0x198] sm:$0xff]
    %v1115 = vld [vmem:[#allocation7 + $0x1a0] sm:$0xff]
    %v1116 = vld [vmem:[#allocation7 + $0x1a8] sm:$0xff]
    %v1117 = vld [vmem:[#allocation7 + $0x1b0] sm:$0xff]
    %v1118 = vld [vmem:[#allocation7 + $0x1b8] sm:$0xff]
    %v1119 = vld [vmem:[#allocation7 + $0x1c0] sm:$0xff]
    %v1120 = vld [vmem:[#allocation7 + $0x1c8] sm:$0xff]
    %v1121 = vld [vmem:[#allocation7 + $0x1d0] sm:$0xff]
    %v1122 = vld [vmem:[#allocation7 + $0x1d8] sm:$0xff]
    %v1123 = vld [vmem:[#allocation7 + $0x1e0] sm:$0xff]
    %v1124 = vld [vmem:[#allocation7 + $0x1e8] sm:$0xff]
    %v1125 = vld [vmem:[#allocation7 + $0x1f0] sm:$0xff]
    %v1126 = vld [vmem:[#allocation7 + $0x1f8] sm:$0xff]
    %v1127 = vld [vmem:[#allocation7 + $0x200] sm:$0xff]
    %v1128 = vld [vmem:[#allocation7 + $0x208] sm:$0xff]
    %v1129 = vld [vmem:[#allocation7 + $0x210] sm:$0xff]
    %v1130 = vld [vmem:[#allocation7 + $0x218] sm:$0xff]
    %v1131 = vld [vmem:[#allocation7 + $0x220] sm:$0xff]
    %v1132 = vld [vmem:[#allocation7 + $0x228] sm:$0xff]
    %v1133 = vld [vmem:[#allocation7 + $0x230] sm:$0xff]
    %v1134 = vld [vmem:[#allocation7 + $0x238] sm:$0xff]
    %v1135 = vld [vmem:[#allocation7 + $0x240] sm:$0xff]
    %v1136 = vld [vmem:[#allocation7 + $0x248] sm:$0xff]
    %v1137 = vld [vmem:[#allocation7 + $0x250] sm:$0xff]
    %v1138 = vld [vmem:[#allocation7 + $0x258] sm:$0xff]
    %v1139 = vld [vmem:[#allocation7 + $0x260] sm:$0xff]
    %v1140 = vld [vmem:[#allocation7 + $0x268] sm:$0xff]
    %v1141 = vld [vmem:[#allocation7 + $0x270] sm:$0xff]
    %v1142 = vld [vmem:[#allocation7 + $0x278] sm:$0xff]
    %v1143 = vld [vmem:[#allocation7 + $0x280] sm:$0xff]
    %v1144 = vld [vmem:[#allocation7 + $0x288] sm:$0xff]
    %v1145 = vld [vmem:[#allocation7 + $0x290] sm:$0xff]
    %v1146 = vld [vmem:[#allocation7 + $0x298] sm:$0xff]
    %v1147 = vld [vmem:[#allocation7 + $0x2a0] sm:$0xff]
    %v1148 = vld [vmem:[#allocation7 + $0x2a8] sm:$0xff]
    %v1149 = vld [vmem:[#allocation7 + $0x2b0] sm:$0xff]
    %v1150 = vld [vmem:[#allocation7 + $0x2b8] sm:$0xff]
    %v1151 = vld [vmem:[#allocation7 + $0x2c0] sm:$0xff]
    %v1152 = vld [vmem:[#allocation7 + $0x2c8] sm:$0xff]
    %v1153 = vld [vmem:[#allocation7 + $0x2d0] sm:$0xff]
    %v1154 = vld [vmem:[#allocation7 + $0x2d8] sm:$0xff]
    %v1155 = vld [vmem:[#allocation7 + $0x2e0] sm:$0xff]
    %v1156 = vld [vmem:[#allocation7 + $0x2e8] sm:$0xff]
    %v1157 = vld [vmem:[#allocation7 + $0x2f0] sm:$0xff]
    %v1158 = vld [vmem:[#allocation7 + $0x2f8] sm:$0xff]
    %v1159 = vld [vmem:[#allocation7 + $0x300] sm:$0xff]
    %v1160 = vld [vmem:[#allocation7 + $0x308] sm:$0xff]
    %v1161 = vld [vmem:[#allocation7 + $0x310] sm:$0xff]
    %v1162 = vld [vmem:[#allocation7 + $0x318] sm:$0xff]
    %v1163 = vld [vmem:[#allocation7 + $0x320] sm:$0xff]
    %v1164 = vld [vmem:[#allocation7 + $0x328] sm:$0xff]
    %v1165 = vld [vmem:[#allocation7 + $0x330] sm:$0xff]
    %v1166 = vld [vmem:[#allocation7 + $0x338] sm:$0xff]
    %v1167 = vld [vmem:[#allocation7 + $0x340] sm:$0xff]
    %v1168 = vld [vmem:[#allocation7 + $0x348] sm:$0xff]
    %v1169 = vld [vmem:[#allocation7 + $0x350] sm:$0xff]
    %v1170 = vld [vmem:[#allocation7 + $0x358] sm:$0xff]
    %v1171 = vld [vmem:[#allocation7 + $0x360] sm:$0xff]
    %v1172 = vld [vmem:[#allocation7 + $0x368] sm:$0xff]
    %v1173 = vld [vmem:[#allocation7 + $0x370] sm:$0xff]
    %v1174 = vld [vmem:[#allocation7 + $0x378] sm:$0xff]
    %v1175 = vld [vmem:[%s4] sm:$0x3]
    %v1177 = vlaneseq
    %v1178 = vshrl.u32 %v1177, 7
    %v1179 = vsub.s32 0, %v1178
    %v1180 = vrot.slane %v1175, %v1179
    %v1181 = vlaneseq
    %v1182 = vshrl.u32 %v1181, 7
    %v1183 = vsub.s32 1, %v1182
    %v1184 = vrot.slane %v1175, %v1183
    %v1299 = vunpack.c.l.b16 %v1063
    %v1300 = vunpack.c.h.b16 %v1063
    %v1301 = vunpack.c.l.b16 %v1064
    %v1302 = vunpack.c.h.b16 %v1064
    %v1303 = vunpack.c.l.b16 %v1065
    %v1304 = vunpack.c.h.b16 %v1065
    %v1305 = vunpack.c.l.b16 %v1066
    %v1306 = vunpack.c.h.b16 %v1066
    %v1307 = vunpack.c.l.b16 %v1067
    %v1308 = vunpack.c.h.b16 %v1067
    %v1309 = vunpack.c.l.b16 %v1068
    %v1310 = vunpack.c.h.b16 %v1068
    %v1311 = vunpack.c.l.b16 %v1069
    %v1312 = vunpack.c.h.b16 %v1069
    %v1313 = vunpack.c.l.b16 %v1070
    %v1314 = vunpack.c.h.b16 %v1070
    %v1315 = vunpack.c.l.b16 %v1071
    %v1316 = vunpack.c.h.b16 %v1071
    %v1317 = vunpack.c.l.b16 %v1072
    %v1318 = vunpack.c.h.b16 %v1072
    %v1319 = vunpack.c.l.b16 %v1073
    %v1320 = vunpack.c.h.b16 %v1073
    %v1321 = vunpack.c.l.b16 %v1074
    %v1322 = vunpack.c.h.b16 %v1074
    %v1323 = vunpack.c.l.b16 %v1075
    %v1324 = vunpack.c.h.b16 %v1075
    %v1325 = vunpack.c.l.b16 %v1076
    %v1326 = vunpack.c.h.b16 %v1076
    %v1327 = vunpack.c.l.b16 %v1077
    %v1328 = vunpack.c.h.b16 %v1077
    %v1329 = vunpack.c.l.b16 %v1078
    %v1330 = vunpack.c.h.b16 %v1078
    %v1331 = vunpack.c.l.b16 %v1079
    %v1332 = vunpack.c.h.b16 %v1079
    %v1333 = vunpack.c.l.b16 %v1080
    %v1334 = vunpack.c.h.b16 %v1080
    %v1335 = vunpack.c.l.b16 %v1081
    %v1336 = vunpack.c.h.b16 %v1081
    %v1337 = vunpack.c.l.b16 %v1082
    %v1338 = vunpack.c.h.b16 %v1082
    %v1339 = vunpack.c.l.b16 %v1083
    %v1340 = vunpack.c.h.b16 %v1083
    %v1341 = vunpack.c.l.b16 %v1084
    %v1342 = vunpack.c.h.b16 %v1084
    %v1343 = vunpack.c.l.b16 %v1085
    %v1344 = vunpack.c.h.b16 %v1085
    %v1345 = vunpack.c.l.b16 %v1086
    %v1346 = vunpack.c.h.b16 %v1086
    %v1347 = vunpack.c.l.b16 %v1087
    %v1348 = vunpack.c.h.b16 %v1087
    %v1349 = vunpack.c.l.b16 %v1088
    %v1350 = vunpack.c.h.b16 %v1088
    %v1351 = vunpack.c.l.b16 %v1089
    %v1352 = vunpack.c.h.b16 %v1089
    %v1353 = vunpack.c.l.b16 %v1090
    %v1354 = vunpack.c.h.b16 %v1090
    %v1355 = vunpack.c.l.b16 %v1091
    %v1356 = vunpack.c.h.b16 %v1091
    %v1357 = vunpack.c.l.b16 %v1092
    %v1358 = vunpack.c.h.b16 %v1092
    %v1359 = vunpack.c.l.b16 %v1093
    %v1360 = vunpack.c.h.b16 %v1093
    %v1361 = vunpack.c.l.b16 %v1094
    %v1362 = vunpack.c.h.b16 %v1094
    %v1363 = vunpack.c.l.b16 %v1095
    %v1364 = vunpack.c.h.b16 %v1095
    %v1365 = vunpack.c.l.b16 %v1096
    %v1366 = vunpack.c.h.b16 %v1096
    %v1367 = vunpack.c.l.b16 %v1097
    %v1368 = vunpack.c.h.b16 %v1097
    %v1369 = vunpack.c.l.b16 %v1098
    %v1370 = vunpack.c.h.b16 %v1098
    %v1371 = vunpack.c.l.b16 %v1099
    %v1372 = vunpack.c.h.b16 %v1099
    %v1373 = vunpack.c.l.b16 %v1100
    %v1374 = vunpack.c.h.b16 %v1100
    %v1375 = vunpack.c.l.b16 %v1101
    %v1376 = vunpack.c.h.b16 %v1101
    %v1377 = vunpack.c.l.b16 %v1102
    %v1378 = vunpack.c.h.b16 %v1102
    %v1379 = vunpack.c.l.b16 %v1103
    %v1380 = vunpack.c.h.b16 %v1103
    %v1381 = vunpack.c.l.b16 %v1104
    %v1382 = vunpack.c.h.b16 %v1104
    %v1383 = vunpack.c.l.b16 %v1105
    %v1384 = vunpack.c.h.b16 %v1105
    %v1385 = vunpack.c.l.b16 %v1106
    %v1386 = vunpack.c.h.b16 %v1106
    %v1387 = vunpack.c.l.b16 %v1107
    %v1388 = vunpack.c.h.b16 %v1107
    %v1389 = vunpack.c.l.b16 %v1108
    %v1390 = vunpack.c.h.b16 %v1108
    %v1391 = vunpack.c.l.b16 %v1109
    %v1392 = vunpack.c.h.b16 %v1109
    %v1393 = vunpack.c.l.b16 %v1110
    %v1394 = vunpack.c.h.b16 %v1110
    %v1395 = vunpack.c.l.b16 %v1111
    %v1396 = vunpack.c.h.b16 %v1111
    %v1397 = vunpack.c.l.b16 %v1112
    %v1398 = vunpack.c.h.b16 %v1112
    %v1399 = vunpack.c.l.b16 %v1113
    %v1400 = vunpack.c.h.b16 %v1113
    %v1401 = vunpack.c.l.b16 %v1114
    %v1402 = vunpack.c.h.b16 %v1114
    %v1403 = vunpack.c.l.b16 %v1115
    %v1404 = vunpack.c.h.b16 %v1115
    %v1405 = vunpack.c.l.b16 %v1116
    %v1406 = vunpack.c.h.b16 %v1116
    %v1407 = vunpack.c.l.b16 %v1117
    %v1408 = vunpack.c.h.b16 %v1117
    %v1409 = vunpack.c.l.b16 %v1118
    %v1410 = vunpack.c.h.b16 %v1118
    %v1411 = vunpack.c.l.b16 %v1119
    %v1412 = vunpack.c.h.b16 %v1119
    %v1413 = vunpack.c.l.b16 %v1120
    %v1414 = vunpack.c.h.b16 %v1120
    %v1415 = vunpack.c.l.b16 %v1121
    %v1416 = vunpack.c.h.b16 %v1121
    %v1417 = vunpack.c.l.b16 %v1122
    %v1418 = vunpack.c.h.b16 %v1122
    %v1419 = vunpack.c.l.b16 %v1123
    %v1420 = vunpack.c.h.b16 %v1123
    %v1421 = vunpack.c.l.b16 %v1124
    %v1422 = vunpack.c.h.b16 %v1124
    %v1423 = vunpack.c.l.b16 %v1125
    %v1424 = vunpack.c.h.b16 %v1125
    %v1425 = vunpack.c.l.b16 %v1126
    %v1426 = vunpack.c.h.b16 %v1126
    %v1427 = vunpack.c.l.b16 %v1127
    %v1428 = vunpack.c.h.b16 %v1127
    %v1429 = vunpack.c.l.b16 %v1128
    %v1430 = vunpack.c.h.b16 %v1128
    %v1431 = vunpack.c.l.b16 %v1129
    %v1432 = vunpack.c.h.b16 %v1129
    %v1433 = vunpack.c.l.b16 %v1130
    %v1434 = vunpack.c.h.b16 %v1130
    %v1435 = vunpack.c.l.b16 %v1131
    %v1436 = vunpack.c.h.b16 %v1131
    %v1437 = vunpack.c.l.b16 %v1132
    %v1438 = vunpack.c.h.b16 %v1132
    %v1439 = vunpack.c.l.b16 %v1133
    %v1440 = vunpack.c.h.b16 %v1133
    %v1441 = vunpack.c.l.b16 %v1134
    %v1442 = vunpack.c.h.b16 %v1134
    %v1443 = vunpack.c.l.b16 %v1135
    %v1444 = vunpack.c.h.b16 %v1135
    %v1445 = vunpack.c.l.b16 %v1136
    %v1446 = vunpack.c.h.b16 %v1136
    %v1447 = vunpack.c.l.b16 %v1137
    %v1448 = vunpack.c.h.b16 %v1137
    %v1449 = vunpack.c.l.b16 %v1138
    %v1450 = vunpack.c.h.b16 %v1138
    %v1451 = vunpack.c.l.b16 %v1139
    %v1452 = vunpack.c.h.b16 %v1139
    %v1453 = vunpack.c.l.b16 %v1140
    %v1454 = vunpack.c.h.b16 %v1140
    %v1455 = vunpack.c.l.b16 %v1141
    %v1456 = vunpack.c.h.b16 %v1141
    %v1457 = vunpack.c.l.b16 %v1142
    %v1458 = vunpack.c.h.b16 %v1142
    %v1459 = vunpack.c.l.b16 %v1143
    %v1460 = vunpack.c.h.b16 %v1143
    %v1461 = vunpack.c.l.b16 %v1144
    %v1462 = vunpack.c.h.b16 %v1144
    %v1463 = vunpack.c.l.b16 %v1145
    %v1464 = vunpack.c.h.b16 %v1145
    %v1465 = vunpack.c.l.b16 %v1146
    %v1466 = vunpack.c.h.b16 %v1146
    %v1467 = vunpack.c.l.b16 %v1147
    %v1468 = vunpack.c.h.b16 %v1147
    %v1469 = vunpack.c.l.b16 %v1148
    %v1470 = vunpack.c.h.b16 %v1148
    %v1471 = vunpack.c.l.b16 %v1149
    %v1472 = vunpack.c.h.b16 %v1149
    %v1473 = vunpack.c.l.b16 %v1150
    %v1474 = vunpack.c.h.b16 %v1150
    %v1475 = vunpack.c.l.b16 %v1151
    %v1476 = vunpack.c.h.b16 %v1151
    %v1477 = vunpack.c.l.b16 %v1152
    %v1478 = vunpack.c.h.b16 %v1152
    %v1479 = vunpack.c.l.b16 %v1153
    %v1480 = vunpack.c.h.b16 %v1153
    %v1481 = vunpack.c.l.b16 %v1154
    %v1482 = vunpack.c.h.b16 %v1154
    %v1483 = vunpack.c.l.b16 %v1155
    %v1484 = vunpack.c.h.b16 %v1155
    %v1485 = vunpack.c.l.b16 %v1156
    %v1486 = vunpack.c.h.b16 %v1156
    %v1487 = vunpack.c.l.b16 %v1157
    %v1488 = vunpack.c.h.b16 %v1157
    %v1489 = vunpack.c.l.b16 %v1158
    %v1490 = vunpack.c.h.b16 %v1158
    %v1491 = vunpack.c.l.b16 %v1159
    %v1492 = vunpack.c.h.b16 %v1159
    %v1493 = vunpack.c.l.b16 %v1160
    %v1494 = vunpack.c.h.b16 %v1160
    %v1495 = vunpack.c.l.b16 %v1161
    %v1496 = vunpack.c.h.b16 %v1161
    %v1497 = vunpack.c.l.b16 %v1162
    %v1498 = vunpack.c.h.b16 %v1162
    %v1499 = vunpack.c.l.b16 %v1163
    %v1500 = vunpack.c.h.b16 %v1163
    %v1501 = vunpack.c.l.b16 %v1164
    %v1502 = vunpack.c.h.b16 %v1164
    %v1503 = vunpack.c.l.b16 %v1165
    %v1504 = vunpack.c.h.b16 %v1165
    %v1505 = vunpack.c.l.b16 %v1166
    %v1506 = vunpack.c.h.b16 %v1166
    %v1507 = vunpack.c.l.b16 %v1167
    %v1508 = vunpack.c.h.b16 %v1167
    %v1509 = vunpack.c.l.b16 %v1168
    %v1510 = vunpack.c.h.b16 %v1168
    %v1511 = vunpack.c.l.b16 %v1169
    %v1512 = vunpack.c.h.b16 %v1169
    %v1513 = vunpack.c.l.b16 %v1170
    %v1514 = vunpack.c.h.b16 %v1170
    %v1515 = vunpack.c.l.b16 %v1171
    %v1516 = vunpack.c.h.b16 %v1171
    %v1517 = vunpack.c.l.b16 %v1172
    %v1518 = vunpack.c.h.b16 %v1172
    %v1519 = vunpack.c.l.b16 %v1173
    %v1520 = vunpack.c.h.b16 %v1173
    %v1521 = vunpack.c.l.b16 %v1174
    %v1522 = vunpack.c.h.b16 %v1174
    %v1523 = vpack.c.b16 %v1301, %v1299
    %v1524 = vpack.c.b16 %v1302, %v1300
    %v1525 = vpack.c.b16 %v1305, %v1303
    %v1526 = vpack.c.b16 %v1306, %v1304
    %v1527 = vpack.c.b16 %v1309, %v1307
    %v1528 = vpack.c.b16 %v1310, %v1308
    %v1529 = vpack.c.b16 %v1313, %v1311
    %v1530 = vpack.c.b16 %v1314, %v1312
    %v1531 = vpack.c.b16 %v1317, %v1315
    %v1532 = vpack.c.b16 %v1318, %v1316
    %v1533 = vpack.c.b16 %v1321, %v1319
    %v1534 = vpack.c.b16 %v1322, %v1320
    %v1535 = vpack.c.b16 %v1325, %v1323
    %v1536 = vpack.c.b16 %v1326, %v1324
    %v1537 = vpack.c.b16 %v1329, %v1327
    %v1538 = vpack.c.b16 %v1330, %v1328
    %v1539 = vpack.c.b16 %v1333, %v1331
    %v1540 = vpack.c.b16 %v1334, %v1332
    %v1541 = vpack.c.b16 %v1337, %v1335
    %v1542 = vpack.c.b16 %v1338, %v1336
    %v1543 = vpack.c.b16 %v1341, %v1339
    %v1544 = vpack.c.b16 %v1342, %v1340
    %v1545 = vpack.c.b16 %v1345, %v1343
    %v1546 = vpack.c.b16 %v1346, %v1344
    %v1547 = vpack.c.b16 %v1349, %v1347
    %v1548 = vpack.c.b16 %v1350, %v1348
    %v1549 = vpack.c.b16 %v1353, %v1351
    %v1550 = vpack.c.b16 %v1354, %v1352
    %v1551 = vpack.c.b16 %v1357, %v1355
    %v1552 = vpack.c.b16 %v1358, %v1356
    %v1553 = vpack.c.b16 %v1361, %v1359
    %v1554 = vpack.c.b16 %v1362, %v1360
    %v1555 = vpack.c.b16 %v1365, %v1363
    %v1556 = vpack.c.b16 %v1366, %v1364
    %v1557 = vpack.c.b16 %v1369, %v1367
    %v1558 = vpack.c.b16 %v1370, %v1368
    %v1559 = vpack.c.b16 %v1373, %v1371
    %v1560 = vpack.c.b16 %v1374, %v1372
    %v1561 = vpack.c.b16 %v1377, %v1375
    %v1562 = vpack.c.b16 %v1378, %v1376
    %v1563 = vpack.c.b16 %v1381, %v1379
    %v1564 = vpack.c.b16 %v1382, %v1380
    %v1565 = vpack.c.b16 %v1385, %v1383
    %v1566 = vpack.c.b16 %v1386, %v1384
    %v1567 = vpack.c.b16 %v1389, %v1387
    %v1568 = vpack.c.b16 %v1390, %v1388
    %v1569 = vpack.c.b16 %v1393, %v1391
    %v1570 = vpack.c.b16 %v1394, %v1392
    %v1571 = vpack.c.b16 %v1397, %v1395
    %v1572 = vpack.c.b16 %v1398, %v1396
    %v1573 = vpack.c.b16 %v1401, %v1399
    %v1574 = vpack.c.b16 %v1402, %v1400
    %v1575 = vpack.c.b16 %v1405, %v1403
    %v1576 = vpack.c.b16 %v1406, %v1404
    %v1577 = vpack.c.b16 %v1409, %v1407
    %v1578 = vpack.c.b16 %v1410, %v1408
    %v1579 = vpack.c.b16 %v1413, %v1411
    %v1580 = vpack.c.b16 %v1414, %v1412
    %v1581 = vpack.c.b16 %v1417, %v1415
    %v1582 = vpack.c.b16 %v1418, %v1416
    %v1583 = vpack.c.b16 %v1421, %v1419
    %v1584 = vpack.c.b16 %v1422, %v1420
    %v1585 = vpack.c.b16 %v1425, %v1423
    %v1586 = vpack.c.b16 %v1426, %v1424
    %v1587 = vpack.c.b16 %v1429, %v1427
    %v1588 = vpack.c.b16 %v1430, %v1428
    %v1589 = vpack.c.b16 %v1433, %v1431
    %v1590 = vpack.c.b16 %v1434, %v1432
    %v1591 = vpack.c.b16 %v1437, %v1435
    %v1592 = vpack.c.b16 %v1438, %v1436
    %v1593 = vpack.c.b16 %v1441, %v1439
    %v1594 = vpack.c.b16 %v1442, %v1440
    %v1595 = vpack.c.b16 %v1445, %v1443
    %v1596 = vpack.c.b16 %v1446, %v1444
    %v1597 = vpack.c.b16 %v1449, %v1447
    %v1598 = vpack.c.b16 %v1450, %v1448
    %v1599 = vpack.c.b16 %v1453, %v1451
    %v1600 = vpack.c.b16 %v1454, %v1452
    %v1601 = vpack.c.b16 %v1457, %v1455
    %v1602 = vpack.c.b16 %v1458, %v1456
    %v1603 = vpack.c.b16 %v1461, %v1459
    %v1604 = vpack.c.b16 %v1462, %v1460
    %v1605 = vpack.c.b16 %v1465, %v1463
    %v1606 = vpack.c.b16 %v1466, %v1464
    %v1607 = vpack.c.b16 %v1469, %v1467
    %v1608 = vpack.c.b16 %v1470, %v1468
    %v1609 = vpack.c.b16 %v1473, %v1471
    %v1610 = vpack.c.b16 %v1474, %v1472
    %v1611 = vpack.c.b16 %v1477, %v1475
    %v1612 = vpack.c.b16 %v1478, %v1476
    %v1613 = vpack.c.b16 %v1481, %v1479
    %v1614 = vpack.c.b16 %v1482, %v1480
    %v1615 = vpack.c.b16 %v1485, %v1483
    %v1616 = vpack.c.b16 %v1486, %v1484
    %v1617 = vpack.c.b16 %v1489, %v1487
    %v1618 = vpack.c.b16 %v1490, %v1488
    %v1619 = vpack.c.b16 %v1493, %v1491
    %v1620 = vpack.c.b16 %v1494, %v1492
    %v1621 = vpack.c.b16 %v1497, %v1495
    %v1622 = vpack.c.b16 %v1498, %v1496
    %v1623 = vpack.c.b16 %v1501, %v1499
    %v1624 = vpack.c.b16 %v1502, %v1500
    %v1625 = vpack.c.b16 %v1505, %v1503
    %v1626 = vpack.c.b16 %v1506, %v1504
    %v1627 = vpack.c.b16 %v1509, %v1507
    %v1628 = vpack.c.b16 %v1510, %v1508
    %v1629 = vpack.c.b16 %v1513, %v1511
    %v1630 = vpack.c.b16 %v1514, %v1512
    %v1631 = vpack.c.b16 %v1517, %v1515
    %v1632 = vpack.c.b16 %v1518, %v1516
    %v1633 = vpack.c.b16 %v1521, %v1519
    %v1634 = vpack.c.b16 %v1522, %v1520
    %1747 = vmatprep.subr.bf16.mxu0 %v1524
    %1748 = vmatpush1.bf16.msra.mxu0 %v1523
    %1749 = vmatprep.subr.bf16.mxu0 %v1526
    %1750 = vmatpush1.bf16.msra.mxu0 %v1525
    %1751 = vmatprep.subr.bf16.mxu0 %v1528
    %1752 = vmatpush1.bf16.msra.mxu0 %v1527
    %1753 = vmatprep.subr.bf16.mxu0 %v1530
    %1754 = vmatpush1.bf16.msra.mxu0 %v1529
    %1755 = vmatprep.subr.bf16.mxu0 %v1532
    %1756 = vmatpush1.bf16.msra.mxu0 %v1531
    %1757 = vmatprep.subr.bf16.mxu0 %v1534
    %1758 = vmatpush1.bf16.msra.mxu0 %v1533
    %1759 = vmatprep.subr.bf16.mxu0 %v1536
    %1760 = vmatpush1.bf16.msra.mxu0 %v1535
    %1761 = vmatprep.subr.bf16.mxu0 %v1538
    %1762 = vmatpush1.bf16.msra.mxu0 %v1537
    %1763 = vmatprep.subr.bf16.mxu0 %v1540
    %1764 = vmatpush1.bf16.msra.mxu0 %v1539
    %1765 = vmatprep.subr.bf16.mxu0 %v1542
    %1766 = vmatpush1.bf16.msra.mxu0 %v1541
    %1767 = vmatprep.subr.bf16.mxu0 %v1544
    %1768 = vmatpush1.bf16.msra.mxu0 %v1543
    %1769 = vmatprep.subr.bf16.mxu0 %v1546
    %1770 = vmatpush1.bf16.msra.mxu0 %v1545
    %1771 = vmatprep.subr.bf16.mxu0 %v1548
    %1772 = vmatpush1.bf16.msra.mxu0 %v1547
    %1773 = vmatprep.subr.bf16.mxu0 %v1550
    %1774 = vmatpush1.bf16.msra.mxu0 %v1549
    %1775 = vmatprep.subr.bf16.mxu0 %v1552
    %1776 = vmatpush1.bf16.msra.mxu0 %v1551
    %1777 = vmatprep.subr.bf16.mxu0 %v1554
    %1778 = vmatpush1.bf16.msra.mxu0 %v1553
    %1779 = vmatprep.mubr.bf16.mxu0 %v1057
    %1780 = vmatmul.mubr.bf16.gmra.mrb[0].mxu0 %v1056
    %v1781 = vpop.f32.mrb[0].mxu0
    %v1782 = vadd.f32 %v1180, %v1781
    %v1783 = vpop.f32.mrb[0].mxu0
    %v1784 = vadd.f32 %v1184, %v1783
    %v1785 = vpop.f32.mrb[0].mxu0
    %v1786 = vadd.f32 %v1180, %v1785
    %v1787 = vpop.f32.mrb[0].mxu0
    %v1788 = vadd.f32 %v1184, %v1787
    %1789 = vdwg.mxu0
    %1790 = vmatprep.subr.bf16.mxu0 %v1556
    %1791 = vmatpush1.bf16.msra.mxu0 %v1555
    %1792 = vmatprep.subr.bf16.mxu0 %v1558
    %1793 = vmatpush1.bf16.msra.mxu0 %v1557
    %1794 = vmatprep.subr.bf16.mxu0 %v1560
    %1795 = vmatpush1.bf16.msra.mxu0 %v1559
    %1796 = vmatprep.subr.bf16.mxu0 %v1562
    %1797 = vmatpush1.bf16.msra.mxu0 %v1561
    %1798 = vmatprep.subr.bf16.mxu0 %v1564
    %1799 = vmatpush1.bf16.msra.mxu0 %v1563
    %1800 = vmatprep.subr.bf16.mxu0 %v1566
    %1801 = vmatpush1.bf16.msra.mxu0 %v1565
    %1802 = vmatprep.subr.bf16.mxu0 %v1568
    %1803 = vmatpush1.bf16.msra.mxu0 %v1567
    %1804 = vmatprep.subr.bf16.mxu0 %v1570
    %1805 = vmatpush1.bf16.msra.mxu0 %v1569
    %1806 = vmatprep.subr.bf16.mxu0 %v1572
    %1807 = vmatpush1.bf16.msra.mxu0 %v1571
    %1808 = vmatprep.subr.bf16.mxu0 %v1574
    %1809 = vmatpush1.bf16.msra.mxu0 %v1573
    %1810 = vmatprep.subr.bf16.mxu0 %v1576
    %1811 = vmatpush1.bf16.msra.mxu0 %v1575
    %1812 = vmatprep.subr.bf16.mxu0 %v1578
    %1813 = vmatpush1.bf16.msra.mxu0 %v1577
    %1814 = vmatprep.subr.bf16.mxu0 %v1580
    %1815 = vmatpush1.bf16.msra.mxu0 %v1579
    %1816 = vmatprep.subr.bf16.mxu0 %v1582
    %1817 = vmatpush1.bf16.msra.mxu0 %v1581
    %1818 = vmatprep.subr.bf16.mxu0 %v1584
    %1819 = vmatpush1.bf16.msra.mxu0 %v1583
    %1820 = vmatprep.subr.bf16.mxu0 %v1586
    %1821 = vmatpush1.bf16.msra.mxu0 %v1585
    %1822 = vmatprep.mubr.bf16.mxu0 %v1059
    %1823 = vmatmul.mubr.bf16.gmra.mrb[0].mxu0 %v1058
    %v1824 = vpop.f32.mrb[0].mxu0
    %v1825 = vadd.f32 %v1782, %v1824
    %v1826 = vpop.f32.mrb[0].mxu0
    %v1827 = vadd.f32 %v1784, %v1826
    %v1828 = vpop.f32.mrb[0].mxu0
    %v1829 = vadd.f32 %v1786, %v1828
    %v1830 = vpop.f32.mrb[0].mxu0
    %v1831 = vadd.f32 %v1788, %v1830
    %1832 = vdwg.mxu0
    %1833 = vmatprep.subr.bf16.mxu0 %v1588
    %1834 = vmatpush1.bf16.msra.mxu0 %v1587
    %1835 = vmatprep.subr.bf16.mxu0 %v1590
    %1836 = vmatpush1.bf16.msra.mxu0 %v1589
    %1837 = vmatprep.subr.bf16.mxu0 %v1592
    %1838 = vmatpush1.bf16.msra.mxu0 %v1591
    %1839 = vmatprep.subr.bf16.mxu0 %v1594
    %1840 = vmatpush1.bf16.msra.mxu0 %v1593
    %1841 = vmatprep.subr.bf16.mxu0 %v1596
    %1842 = vmatpush1.bf16.msra.mxu0 %v1595
    %1843 = vmatprep.subr.bf16.mxu0 %v1598
    %1844 = vmatpush1.bf16.msra.mxu0 %v1597
    %1845 = vmatprep.subr.bf16.mxu0 %v1600
    %1846 = vmatpush1.bf16.msra.mxu0 %v1599
    %1847 = vmatprep.subr.bf16.mxu0 %v1602
    %1848 = vmatpush1.bf16.msra.mxu0 %v1601
    %1849 = vmatprep.subr.bf16.mxu0 %v1604
    %1850 = vmatpush1.bf16.msra.mxu0 %v1603
    %1851 = vmatprep.subr.bf16.mxu0 %v1606
    %1852 = vmatpush1.bf16.msra.mxu0 %v1605
    %1853 = vmatprep.subr.bf16.mxu0 %v1608
    %1854 = vmatpush1.bf16.msra.mxu0 %v1607
    %1855 = vmatprep.subr.bf16.mxu0 %v1610
    %1856 = vmatpush1.bf16.msra.mxu0 %v1609
    %1857 = vmatprep.subr.bf16.mxu0 %v1612
    %1858 = vmatpush1.bf16.msra.mxu0 %v1611
    %1859 = vmatprep.subr.bf16.mxu0 %v1614
    %1860 = vmatpush1.bf16.msra.mxu0 %v1613
    %1861 = vmatprep.subr.bf16.mxu0 %v1616
    %1862 = vmatpush1.bf16.msra.mxu0 %v1615
    %1863 = vmatprep.subr.bf16.mxu0 %v1618
    %1864 = vmatpush1.bf16.msra.mxu0 %v1617
    %1865 = vmatprep.mubr.bf16.mxu0 %v1061
    %1866 = vmatmul.mubr.bf16.gmra.mrb[0].mxu0 %v1060
    %v1867 = vpop.f32.mrb[0].mxu0
    %v1868 = vadd.f32 %v1825, %v1867
    %v1869 = vpop.f32.mrb[0].mxu0
    %v1870 = vadd.f32 %v1827, %v1869
    %v1871 = vpop.f32.mrb[0].mxu0
    %v1872 = vadd.f32 %v1829, %v1871
    %v1873 = vpop.f32.mrb[0].mxu0
    %v1874 = vadd.f32 %v1831, %v1873
    %1875 = vdwg.mxu0
    %1876 = vmatprep.subr.bf16.mxu0 %v1620
    %1877 = vmatpush1.bf16.msra.mxu0 %v1619
    %1878 = vmatprep.subr.bf16.mxu0 %v1622
    %1879 = vmatpush1.bf16.msra.mxu0 %v1621
    %1880 = vmatprep.subr.bf16.mxu0 %v1624
    %1881 = vmatpush1.bf16.msra.mxu0 %v1623
    %1882 = vmatprep.subr.bf16.mxu0 %v1626
    %1883 = vmatpush1.bf16.msra.mxu0 %v1625
    %1884 = vmatprep.subr.bf16.mxu0 %v1628
    %1885 = vmatpush1.bf16.msra.mxu0 %v1627
    %1886 = vmatprep.subr.bf16.mxu0 %v1630
    %1887 = vmatpush1.bf16.msra.mxu0 %v1629
    %1888 = vmatprep.subr.bf16.mxu0 %v1632
    %1889 = vmatpush1.bf16.msra.mxu0 %v1631
    %1890 = vmatprep.subr.bf16.mxu0 %v1634
    %1891 = vmatpush1.bf16.msra.mxu0 %v1633
    %1892 = vmatprep.subr.bf16.mxu0 0
    %1893 = vmatpush1.bf16.msra.mxu0 0
    %1894 = vmatprep.subr.bf16.mxu0 0
    %1895 = vmatpush1.bf16.msra.mxu0 0
    %1896 = vmatprep.subr.bf16.mxu0 0
    %1897 = vmatpush1.bf16.msra.mxu0 0
    %1898 = vmatprep.subr.bf16.mxu0 0
    %1899 = vmatpush1.bf16.msra.mxu0 0
    %1900 = vmatprep.subr.bf16.mxu0 0
    %1901 = vmatpush1.bf16.msra.mxu0 0
    %1902 = vmatprep.subr.bf16.mxu0 0
    %1903 = vmatpush1.bf16.msra.mxu0 0
    %1904 = vmatprep.subr.bf16.mxu0 0
    %1905 = vmatpush1.bf16.msra.mxu0 0
    %1906 = vmatprep.subr.bf16.mxu0 0
    %1907 = vmatpush1.bf16.msra.mxu0 0
    %1908 = vmatprep.mubr.bf16.mxu0 0
    %1909 = vmatmul.mubr.bf16.gmra.mrb[0].mxu0 %v1062
    %v1910 = vpop.f32.mrb[0].mxu0
    %v1911 = vadd.f32 %v1868, %v1910
    %v1912 = vpop.f32.mrb[0].mxu0
    %v1913 = vadd.f32 %v1870, %v1912
    %v1914 = vpop.f32.mrb[0].mxu0
    %v1915 = vadd.f32 %v1872, %v1914
    %v1916 = vpop.f32.mrb[0].mxu0
    %v1917 = vadd.f32 %v1874, %v1916
    %1918 = vdwg.mxu0
    %1919 = vst [vmem:[#allocation8] sm:$0xff] %v1911
    %1920 = vst [vmem:[#allocation8 + $0x8] sm:$0xff] %v1913
    %1921 = vst [vmem:[#allocation8 + $0x10] sm:$0xff] %v1915
    %1922 = vst [vmem:[#allocation8 + $0x18] sm:$0xff] %v1917
    // Predicated region
    $region34: #{tpu_custom_call.1} parent=1 // pred_check
      _
    $region35: #{tpu_custom_call.1} parent=1 // pred_check_branch
      %1924 = sbr.rel (0) target = $region37
    $region36: #{tpu_custom_call.1} parent=1 // pred_region
      %s1926 = ssub.s32 512, 512
      %1927 = vsyncadd [#allocation4], %s1926
      %s1928 = sshll.u32 [#allocation8], 4
      %s1929 = int_to_ptr.vmem [resolvable:$true] %s1928
      %1934 = dma.vmem_to_hbm [thread:$0]  %s1929, 512, %s5, [#allocation4], 256, 256, 16
    $region37: #{tpu_custom_call.1} parent=1 // pred_fallthru
      _
    // Predicated region
    $region38: #{tpu_custom_call.1} parent=1 // pred_check
      _
    $region39: #{tpu_custom_call.1} parent=1 // pred_check_branch
      %1936 = sbr.rel (0) target = $region41
    $region40: #{tpu_custom_call.1} parent=1 // pred_region
      %1937 = dma.done [#allocation4], 512
    $region41: #{tpu_custom_call.1} parent=1 // pred_fallthru
      _
    %1938 = vsyncpa [#allocation3], 1
    %1939 = vsyncpa [#allocation6], 1
    %1940 = vsyncpa [#allocation4], 1

</llo_original>
